<compile_context>
chip_gen: v5e
topology: v5e:2x2
jax: 0.10.0
libtpu: 0.0.40
codegen_flags: <defaults>
</compile_context>

<pallas_src>
import functools

import jax
import jax.numpy as jnp
from jax.experimental import pallas as pl
from jax.experimental.pallas import tpu as pltpu

LANE = 128
SUBLANE = 8


def _round_up(x, m):
    return (x + m - 1) // m * m


def gru_fc_kernel(emb_ref, wih_ref, bi_ref, whh_ref, bhn_ref, wfc_ref, bfc_ref,
                  out_ref, gi_ref, outs_ref):
    """Bidirectional single-layer GRU over time + final Linear for one batch tile.

    emb_ref : (1, T*Bt, E)    bf16, rows ordered (t, b)
    wih_ref : (E, 2*GW)       bf16, [fwd r|z|n | pad | bwd r|z|n | pad]
    bi_ref  : (1, 2*GW)       f32,  b_ih (+ b_hh folded in for r,z gates)
    whh_ref : (2H, 2*GW)      bf16, rows 0:H -> fwd gates, H:2H -> bwd gates
    bhn_ref : (1, 2H)         f32,  [b_hn_fwd | b_hn_bwd]
    wfc_ref : (2H, Op)        bf16
    bfc_ref : (1, Op)         f32
    out_ref : (T, Bt, Op)     f32
    gi_ref  : (T*Bt, 2*GW)    f32 scratch (hoisted input projections)
    outs_ref: (T*Bt, 2H)      f32 scratch ([fwd|bwd] hidden states, fc input)
    """
    T, Bt, Op = out_ref.shape
    H = whh_ref.shape[0] // 2
    GW = wih_ref.shape[1] // 2

    # 1) Input projections for BOTH directions in one bf16 MXU matmul, hoisted
    #    out of the sequential loop.  bi_ref already folds b_ih (all gates) +
    #    b_hh (r and z gates only).
    gi = jnp.dot(emb_ref[0], wih_ref[...], preferred_element_type=jnp.float32)
    gi_ref[...] = gi + bi_ref[...]

    # 2) Hoist weight / bias loads above the loop.
    whh = whh_ref[...]                       # (2H, 2*GW) bf16
    bhn = bhn_ref[...]                       # (1, 2H)
    bhn_f = bhn[:, 0:H]
    bhn_b = bhn[:, H:2 * H]

    # 3) Sequential recurrence.  Forward + backward fused into one compact
    #    (Bt, 2H) x (2H, 2*GW) bf16 dot per step.
    h = jnp.zeros((Bt, 2 * H), jnp.float32)            # [h_fwd | h_bwd]
    for t in range(T):                                 # static T -> fully unrolled
        gh = jnp.dot(h.astype(whh.dtype), whh,
                     preferred_element_type=jnp.float32)          # (Bt, 2*GW)
        gi_f = gi_ref[t * Bt:(t + 1) * Bt, :]
        gi_b = gi_ref[(T - 1 - t) * Bt:(T - t) * Bt, :]

        # forward direction: gates r|z|n at lane offsets 0 / H / 2H
        r_f = jax.nn.sigmoid(gi_f[:, 0:H] + gh[:, 0:H])
        z_f = jax.nn.sigmoid(gi_f[:, H:2 * H] + gh[:, H:2 * H])
        n_f = jnp.tanh(gi_f[:, 2 * H:3 * H] + r_f * (gh[:, 2 * H:3 * H] + bhn_f))
        h_f = (1.0 - z_f) * n_f + z_f * h[:, 0:H]

        # backward direction: same offsets within the second GW-lane group
        r_b = jax.nn.sigmoid(gi_b[:, GW:GW + H] + gh[:, GW:GW + H])
        z_b = jax.nn.sigmoid(gi_b[:, GW + H:GW + 2 * H] + gh[:, GW + H:GW + 2 * H])
        n_b = jnp.tanh(gi_b[:, GW + 2 * H:GW + 3 * H]
                       + r_b * (gh[:, GW + 2 * H:GW + 3 * H] + bhn_b))
        h_b = (1.0 - z_b) * n_b + z_b * h[:, H:2 * H]

        # Write hidden states in place into the compact fc-input scratch.
        # Every (row, lane) of outs_ref is written exactly once over the loop.
        outs_ref[t * Bt:(t + 1) * Bt, 0:H] = h_f
        outs_ref[(T - 1 - t) * Bt:(T - t) * Bt, H:2 * H] = h_b

        h = jnp.concatenate([h_f, h_b], axis=-1)

    # 4) Final Linear on the compact (T*Bt, 2H) scratch (bf16 MXU dot).
    preds = jnp.dot(outs_ref[...].astype(whh.dtype), wfc_ref[...],
                    preferred_element_type=jnp.float32) + bfc_ref[...]
    out_ref[...] = preds.reshape(T, Bt, Op)


def _pack_params(params, E, H, O, GW, Op):
    """Pack PyTorch-layout weights into compact, bf16 fused kernel operands."""
    f32, bf16 = jnp.float32, jnp.bfloat16
    wih_cat = jnp.zeros((E, 2 * GW), f32)       # [fwd r|z|n | pad | bwd r|z|n | pad]
    whh_blk = jnp.zeros((2 * H, 2 * GW), f32)   # rows 0:H fwd, H:2H bwd (block-diag)
    bi_cat = jnp.zeros((1, 2 * GW), f32)        # b_ih (+ b_hh for r,z)
    bhn_cat = jnp.zeros((1, 2 * H), f32)        # b_hn only (stays inside r*(...))

    for d, sfx in enumerate(("f", "b")):
        wih = params[f"wih_{sfx}"].T            # (E, 3H), PyTorch gate order r|z|n
        whh = params[f"whh_{sfx}"].T            # (H, 3H)
        bih = params[f"bih_{sfx}"]              # (3H,)
        bhh = params[f"bhh_{sfx}"]              # (3H,)
        c0 = GW * d
        wih_cat = wih_cat.at[:, c0:c0 + 3 * H].set(wih)
        whh_blk = whh_blk.at[H * d:H * (d + 1), c0:c0 + 3 * H].set(whh)
        # r, z: both biases fold into the input projection.
        bi_cat = bi_cat.at[0, c0:c0 + 2 * H].set(bih[:2 * H] + bhh[:2 * H])
        # n: b_in folds in, b_hn must stay inside the r*(...) term.
        bi_cat = bi_cat.at[0, c0 + 2 * H:c0 + 3 * H].set(bih[2 * H:])
        bhn_cat = bhn_cat.at[0, H * d:H * (d + 1)].set(bhh[2 * H:])

    wfc_cat = jnp.zeros((2 * H, Op), f32).at[:, :O].set(params["wfc"].T)
    bfc_cat = jnp.zeros((1, Op), f32).at[0, :O].set(params["bfc"])
    return (wih_cat.astype(bf16), bi_cat, whh_blk.astype(bf16), bhn_cat,
            wfc_cat.astype(bf16), bfc_cat)


@functools.partial(jax.jit, static_argnames=("num_batch_tiles",))
def gru_pos_tagger_forward(text, params, num_batch_tiles=1):
    """text: (T, B) int32 token ids -> predictions (T, B, O) float32.

    num_batch_tiles=1 runs the whole batch in one grid step (best for v5e/v6e);
    num_batch_tiles=2 gives one "parallel" tile per TensorCore on v7x.
    """
    _, E = params["embedding"].shape
    H = params["whh_f"].shape[1]
    O = params["wfc"].shape[0]
    T, B = text.shape

    GW = _round_up(3 * H, LANE)   # all 3 gates of one direction, lane-compact
    Op = _round_up(O, LANE)       # lane-dense output stores

    b_tile = _round_up(pl.cdiv(B, num_batch_tiles), SUBLANE)
    Bp = b_tile * num_batch_tiles

    # Embedding lookup (gather) kept as plain-JAX glue; dropout = identity (eval).
    # Table and activation in bf16; E kept at its real width (no 128 padding).
    emb_tab = params["embedding"].astype(jnp.bfloat16)
    text_p = jnp.pad(text, ((0, 0), (0, Bp - B)))
    emb = jnp.take(emb_tab, text_p, axis=0)                      # (T, Bp, E)
    # Batch-tile-major, (t, b)-ordered rows so the kernel needs no reshape.
    emb = emb.reshape(T, num_batch_tiles, b_tile, E).transpose(1, 0, 2, 3)
    emb = emb.reshape(num_batch_tiles, T * b_tile, E)

    wih_cat, bi_cat, whh_blk, bhn_cat, wfc_cat, bfc_cat = _pack_params(
        params, E, H, O, GW, Op)

    out = pl.pallas_call(
        gru_fc_kernel,
        out_shape=jax.ShapeDtypeStruct((T, Bp, Op), jnp.float32),
        grid=(num_batch_tiles,),
        in_specs=[
            pl.BlockSpec((1, T * b_tile, E), lambda b: (b, 0, 0)),   # embedded
            pl.BlockSpec((E, 2 * GW), lambda b: (0, 0)),             # W_ih fused
            pl.BlockSpec((1, 2 * GW), lambda b: (0, 0)),             # fused input bias
            pl.BlockSpec((2 * H, 2 * GW), lambda b: (0, 0)),         # W_hh block-diag
            pl.BlockSpec((1, 2 * H), lambda b: (0, 0)),              # b_hn
            pl.BlockSpec((2 * H, Op), lambda b: (0, 0)),             # W_fc
            pl.BlockSpec((1, Op), lambda b: (0, 0)),                 # b_fc
        ],
        out_specs=pl.BlockSpec((T, b_tile, Op), lambda b: (0, b, 0)),
        scratch_shapes=[
            pltpu.VMEM((T * b_tile, 2 * GW), jnp.float32),   # hoisted input proj
            pltpu.VMEM((T * b_tile, 2 * H), jnp.float32),    # [fwd|bwd] fc input
        ],
        compiler_params=pltpu.CompilerParams(
            dimension_semantics=("parallel",)),
    )(emb, wih_cat, bi_cat, whh_blk, bhn_cat, wfc_cat, bfc_cat)

    return out[:, :B, :O]


def reference_forward(text, params):
    """Pure-JAX reference matching PyTorch GRU semantics (eval mode, f32)."""
    emb = jnp.take(params["embedding"], text, axis=0)        # (T, B, E)
    T, B, _ = emb.shape
    H = params["whh_f"].shape[1]

    def cell(x, h, wih, whh, bih, bhh):
        gi = x @ wih.T + bih
        gh = h @ whh.T + bhh
        r = jax.nn.sigmoid(gi[:, :H] + gh[:, :H])
        z = jax.nn.sigmoid(gi[:, H:2 * H] + gh[:, H:2 * H])
        n = jnp.tanh(gi[:, 2 * H:] + r * gh[:, 2 * H:])
        return (1.0 - z) * n + z * h

    hf = jnp.zeros((B, H), jnp.float32)
    hb = jnp.zeros((B, H), jnp.float32)
    out_f = [None] * T
    out_b = [None] * T
    for t in range(T):
        hf = cell(emb[t], hf, params["wih_f"], params["whh_f"],
                  params["bih_f"], params["bhh_f"])
        out_f[t] = hf
        tb = T - 1 - t
        hb = cell(emb[tb], hb, params["wih_b"], params["whh_b"],
                  params["bih_b"], params["bhh_b"])
        out_b[tb] = hb
    outs = jnp.concatenate([jnp.stack(out_f), jnp.stack(out_b)], axis=-1)
    return outs @ params["wfc"].T + params["bfc"]


def _bf16_rounded(params):
    """Round the tensors the kernel stores in bf16 (for an apples-to-apples ref)."""
    q = dict(params)
    for k in ("embedding", "wih_f", "whh_f", "wih_b", "whh_b", "wfc"):
        q[k] = params[k].astype(jnp.bfloat16).astype(jnp.float32)
    return q


def init_params(key, input_dim, embedding_dim, hidden_dim, output_dim, pad_idx):
    """Deterministic synthetic parameters in PyTorch layout (r,z,n gate order)."""
    ks = jax.random.split(key, 12)
    H = hidden_dim
    kg = 1.0 / jnp.sqrt(float(H))
    kf = 1.0 / jnp.sqrt(2.0 * H)

    def u(k, shape, bound):
        return jax.random.uniform(k, shape, jnp.float32, -bound, bound)

    emb = jax.random.normal(ks[0], (input_dim, embedding_dim), jnp.float32)
    emb = emb.at[pad_idx].set(0.0)  # padding_idx row is zero

    return {
        "embedding": emb,
        "wih_f": u(ks[1], (3 * H, embedding_dim), kg),
        "whh_f": u(ks[2], (3 * H, H), kg),
        "bih_f": u(ks[3], (3 * H,), kg),
        "bhh_f": u(ks[4], (3 * H,), kg),
        "wih_b": u(ks[5], (3 * H, embedding_dim), kg),
        "whh_b": u(ks[6], (3 * H, H), kg),
        "bih_b": u(ks[7], (3 * H,), kg),
        "bhh_b": u(ks[8], (3 * H,), kg),
        "wfc": u(ks[9], (output_dim, 2 * H), kf),
        "bfc": u(ks[10], (output_dim,), kf),
    }


if __name__ == "__main__":
    INPUT_DIM = 50      # vocab size
    EMBEDDING_DIM = 32
    HIDDEN_DIM = 32
    OUTPUT_DIM = 16
    PAD_IDX = 0
    T, B = 8, 16        # seq_len, batch

    root = jax.random.PRNGKey(0)
    k_params, k_text = jax.random.split(root)

    params = init_params(k_params, INPUT_DIM, EMBEDDING_DIM, HIDDEN_DIM,
                         OUTPUT_DIM, PAD_IDX)
    text = jax.random.randint(k_text, (T, B), 0, INPUT_DIM, dtype=jnp.int32)

    # Single full-batch tile (default; best for v5e/v6e).
    preds = gru_pos_tagger_forward(text, params)
    jax.block_until_ready(preds)
    assert preds.shape == (T, B, OUTPUT_DIM)
    assert preds.dtype == jnp.float32

    # Two batch tiles (one per TensorCore on v7x) -- exercises the grid path.
    preds2 = gru_pos_tagger_forward(text, params, num_batch_tiles=2)
    jax.block_until_ready(preds2)
    assert preds2.shape == (T, B, OUTPUT_DIM)

    # Check against the PyTorch-semantics reference evaluated with the same
    # bf16-rounded weights the kernel stores (isolates layout / recurrence bugs
    # from pure bf16 weight-quantization noise).
    ref_q = reference_forward(text, _bf16_rounded(params))
    err_q = float(jnp.max(jnp.abs(preds - ref_q)))
    err_q2 = float(jnp.max(jnp.abs(preds2 - ref_q)))
    assert err_q < 5e-2, f"max abs error vs bf16-weight reference: {err_q}"
    assert err_q2 < 5e-2, f"max abs error vs bf16-weight reference (2 tiles): {err_q2}"

    # Loose sanity check against the full-f32 reference (bf16 storage noise only).
    ref = reference_forward(text, params)
    err = float(jnp.max(jnp.abs(preds - ref)))
    assert err < 1e-1, f"max abs error vs f32 reference: {err}"

    print("KERNEL_OK")
</pallas_src>

<mosaic_0001>
module attributes {stable_mosaic.version = 11 : i64} {
  func.func @gru_fc_kernel(%arg0: i32, %arg1: memref<1x128x32xbf16, #tpu.memory_space<vmem>>, %arg2: memref<32x256xbf16, #tpu.memory_space<vmem>>, %arg3: memref<1x256xf32, #tpu.memory_space<vmem>>, %arg4: memref<64x256xbf16, #tpu.memory_space<vmem>>, %arg5: memref<1x64xf32, #tpu.memory_space<vmem>>, %arg6: memref<64x128xbf16, #tpu.memory_space<vmem>>, %arg7: memref<1x128xf32, #tpu.memory_space<vmem>>, %arg8: memref<8x16x128xf32, #tpu.memory_space<vmem>>, %arg9: memref<128x256xf32, #tpu.memory_space<vmem>>, %arg10: memref<128x64xf32, #tpu.memory_space<vmem>>) attributes {dimension_semantics = [#tpu.dimension_semantics<parallel>], iteration_bounds = array<i64: 1>, scalar_prefetch = 0 : i64, scratch_operands = 2 : i64, tpu.core_type = #tpu.core_type<tc>, window_params = [{transform_indices = @transform_0, window_bounds = array<i64: 1, 128, 32>}, {pipeline_mode = #tpu.pipeline_mode<synchronous>, transform_indices = @transform_1, window_bounds = array<i64: 32, 256>}, {pipeline_mode = #tpu.pipeline_mode<synchronous>, transform_indices = @transform_2, window_bounds = array<i64: 1, 256>}, {pipeline_mode = #tpu.pipeline_mode<synchronous>, transform_indices = @transform_3, window_bounds = array<i64: 64, 256>}, {pipeline_mode = #tpu.pipeline_mode<synchronous>, transform_indices = @transform_4, window_bounds = array<i64: 1, 64>}, {pipeline_mode = #tpu.pipeline_mode<synchronous>, transform_indices = @transform_5, window_bounds = array<i64: 64, 128>}, {pipeline_mode = #tpu.pipeline_mode<synchronous>, transform_indices = @transform_6, window_bounds = array<i64: 1, 128>}, {transform_indices = @transform_7, window_bounds = array<i64: 8, 16, 128>}]} {
    %c0 = arith.constant 0 : index
    %c0_0 = arith.constant 0 : index
    %c0_1 = arith.constant 0 : index
    %0 = vector.load %arg1[%c0, %c0_0, %c0_1] : memref<1x128x32xbf16, #tpu.memory_space<vmem>>, vector<1x128x32xbf16>
    %1 = vector.shape_cast %0 : vector<1x128x32xbf16> to vector<128x32xbf16>
    %c0_2 = arith.constant 0 : index
    %c0_3 = arith.constant 0 : index
    %2 = vector.load %arg2[%c0_2, %c0_3] : memref<32x256xbf16, #tpu.memory_space<vmem>>, vector<32x256xbf16>
    %cst = arith.constant dense<0.000000e+00> : vector<128x256xf32>
    %3 = tpu.matmul %1, %2, %cst {dimension_numbers = #tpu.dot_dimension_numbers<[1], [0], [0], [1], [0, 0, 1, 1], [], []>} : vector<128x32xbf16>, vector<32x256xbf16>, vector<128x256xf32> -> vector<128x256xf32>
    %c0_4 = arith.constant 0 : index
    %c0_5 = arith.constant 0 : index
    %4 = vector.load %arg3[%c0_4, %c0_5] : memref<1x256xf32, #tpu.memory_space<vmem>>, vector<1x256xf32>
    %5 = vector.broadcast %4 : vector<1x256xf32> to vector<128x256xf32>
    %6 = arith.addf %3, %5 : vector<128x256xf32>
    %c0_6 = arith.constant 0 : index
    %c0_7 = arith.constant 0 : index
    %7 = vector.load %arg9[%c0_6, %c0_7] : memref<128x256xf32, #tpu.memory_space<vmem>>, vector<128x256xf32>
    tpu.vector_store %arg9[%c0_6, %c0_7], %6 {strides = array<i32>} : memref<128x256xf32, #tpu.memory_space<vmem>>, vector<128x256xf32>,
    %c0_8 = arith.constant 0 : index
    %c0_9 = arith.constant 0 : index
    %8 = vector.load %arg4[%c0_8, %c0_9] : memref<64x256xbf16, #tpu.memory_space<vmem>>, vector<64x256xbf16>
    %c0_10 = arith.constant 0 : index
    %c0_11 = arith.constant 0 : index
    %9 = vector.load %arg5[%c0_10, %c0_11] : memref<1x64xf32, #tpu.memory_space<vmem>>, vector<1x64xf32>
    %10 = vector.extract_strided_slice %9 {offsets = [0, 0], sizes = [1, 32], strides = [1, 1]} : vector<1x64xf32> to vector<1x32xf32>
    %11 = vector.extract_strided_slice %9 {offsets = [0, 32], sizes = [1, 32], strides = [1, 1]} : vector<1x64xf32> to vector<1x32xf32>
    %cst_12 = arith.constant 0.000000e+00 : f32
    %12 = vector.broadcast %cst_12 : f32 to vector<16x64xf32>
    %13 = arith.truncf %12 : vector<16x64xf32> to vector<16x64xbf16>
    %cst_13 = arith.constant dense<0.000000e+00> : vector<16x256xf32>
    %14 = tpu.matmul %13, %8, %cst_13 {dimension_numbers = #tpu.dot_dimension_numbers<[1], [0], [0], [1], [0, 0, 1, 1], [], []>} : vector<16x64xbf16>, vector<64x256xbf16>, vector<16x256xf32> -> vector<16x256xf32>
    %c0_14 = arith.constant 0 : index
    %c0_15 = arith.constant 0 : index
    %15 = vector.load %arg9[%c0_14, %c0_15] : memref<128x256xf32, #tpu.memory_space<vmem>>, vector<16x256xf32>
    %c112 = arith.constant 112 : index
    %c0_16 = arith.constant 0 : index
    %16 = vector.load %arg9[%c112, %c0_16] : memref<128x256xf32, #tpu.memory_space<vmem>>, vector<16x256xf32>
    %17 = vector.extract_strided_slice %15 {offsets = [0, 0], sizes = [16, 32], strides = [1, 1]} : vector<16x256xf32> to vector<16x32xf32>
    %18 = vector.extract_strided_slice %14 {offsets = [0, 0], sizes = [16, 32], strides = [1, 1]} : vector<16x256xf32> to vector<16x32xf32>
    %19 = arith.addf %17, %18 : vector<16x32xf32>
    %20 = arith.negf %19 : vector<16x32xf32>
    %21 = math.exp %20 : vector<16x32xf32>
    %cst_17 = arith.constant 1.000000e+00 : f32
    %22 = vector.broadcast %cst_17 : f32 to vector<16x32xf32>
    %23 = arith.addf %22, %21 : vector<16x32xf32>
    %24 = arith.divf %22, %23 : vector<16x32xf32>
    %25 = vector.extract_strided_slice %15 {offsets = [0, 32], sizes = [16, 32], strides = [1, 1]} : vector<16x256xf32> to vector<16x32xf32>
    %26 = vector.extract_strided_slice %14 {offsets = [0, 32], sizes = [16, 32], strides = [1, 1]} : vector<16x256xf32> to vector<16x32xf32>
    %27 = arith.addf %25, %26 : vector<16x32xf32>
    %28 = arith.negf %27 : vector<16x32xf32>
    %29 = math.exp %28 : vector<16x32xf32>
    %cst_18 = arith.constant 1.000000e+00 : f32
    %30 = vector.broadcast %cst_18 : f32 to vector<16x32xf32>
    %31 = arith.addf %30, %29 : vector<16x32xf32>
    %32 = arith.divf %30, %31 : vector<16x32xf32>
    %33 = vector.extract_strided_slice %15 {offsets = [0, 64], sizes = [16, 32], strides = [1, 1]} : vector<16x256xf32> to vector<16x32xf32>
    %34 = vector.extract_strided_slice %14 {offsets = [0, 64], sizes = [16, 32], strides = [1, 1]} : vector<16x256xf32> to vector<16x32xf32>
    %35 = vector.broadcast %10 : vector<1x32xf32> to vector<16x32xf32>
    %36 = arith.addf %34, %35 : vector<16x32xf32>
    %37 = arith.mulf %24, %36 : vector<16x32xf32>
    %38 = arith.addf %33, %37 : vector<16x32xf32>
    %39 = math.tanh %38 : vector<16x32xf32>
    %cst_19 = arith.constant 1.000000e+00 : f32
    %40 = vector.broadcast %cst_19 : f32 to vector<16x32xf32>
    %41 = arith.subf %40, %32 : vector<16x32xf32>
    %42 = arith.mulf %41, %39 : vector<16x32xf32>
    %43 = vector.extract_strided_slice %12 {offsets = [0, 0], sizes = [16, 32], strides = [1, 1]} : vector<16x64xf32> to vector<16x32xf32>
    %44 = arith.mulf %32, %43 : vector<16x32xf32>
    %45 = arith.addf %42, %44 : vector<16x32xf32>
    %46 = vector.extract_strided_slice %16 {offsets = [0, 128], sizes = [16, 32], strides = [1, 1]} : vector<16x256xf32> to vector<16x32xf32>
    %47 = vector.extract_strided_slice %14 {offsets = [0, 128], sizes = [16, 32], strides = [1, 1]} : vector<16x256xf32> to vector<16x32xf32>
    %48 = arith.addf %46, %47 : vector<16x32xf32>
    %49 = arith.negf %48 : vector<16x32xf32>
    %50 = math.exp %49 : vector<16x32xf32>
    %cst_20 = arith.constant 1.000000e+00 : f32
    %51 = vector.broadcast %cst_20 : f32 to vector<16x32xf32>
    %52 = arith.addf %51, %50 : vector<16x32xf32>
    %53 = arith.divf %51, %52 : vector<16x32xf32>
    %54 = vector.extract_strided_slice %16 {offsets = [0, 160], sizes = [16, 32], strides = [1, 1]} : vector<16x256xf32> to vector<16x32xf32>
    %55 = vector.extract_strided_slice %14 {offsets = [0, 160], sizes = [16, 32], strides = [1, 1]} : vector<16x256xf32> to vector<16x32xf32>
    %56 = arith.addf %54, %55 : vector<16x32xf32>
    %57 = arith.negf %56 : vector<16x32xf32>
    %58 = math.exp %57 : vector<16x32xf32>
    %cst_21 = arith.constant 1.000000e+00 : f32
    %59 = vector.broadcast %cst_21 : f32 to vector<16x32xf32>
    %60 = arith.addf %59, %58 : vector<16x32xf32>
    %61 = arith.divf %59, %60 : vector<16x32xf32>
    %62 = vector.extract_strided_slice %16 {offsets = [0, 192], sizes = [16, 32], strides = [1, 1]} : vector<16x256xf32> to vector<16x32xf32>
    %63 = vector.extract_strided_slice %14 {offsets = [0, 192], sizes = [16, 32], strides = [1, 1]} : vector<16x256xf32> to vector<16x32xf32>
    %64 = vector.broadcast %11 : vector<1x32xf32> to vector<16x32xf32>
    %65 = arith.addf %63, %64 : vector<16x32xf32>
    %66 = arith.mulf %53, %65 : vector<16x32xf32>
    %67 = arith.addf %62, %66 : vector<16x32xf32>
    %68 = math.tanh %67 : vector<16x32xf32>
    %cst_22 = arith.constant 1.000000e+00 : f32
    %69 = vector.broadcast %cst_22 : f32 to vector<16x32xf32>
    %70 = arith.subf %69, %61 : vector<16x32xf32>
    %71 = arith.mulf %70, %68 : vector<16x32xf32>
    %72 = vector.extract_strided_slice %12 {offsets = [0, 32], sizes = [16, 32], strides = [1, 1]} : vector<16x64xf32> to vector<16x32xf32>
    %73 = arith.mulf %61, %72 : vector<16x32xf32>
    %74 = arith.addf %71, %73 : vector<16x32xf32>
    %c0_23 = arith.constant 0 : index
    %c0_24 = arith.constant 0 : index
    %75 = vector.load %arg10[%c0_23, %c0_24] : memref<128x64xf32, #tpu.memory_space<vmem>>, vector<16x32xf32>
    tpu.vector_store %arg10[%c0_23, %c0_24], %45 {strides = array<i32>} : memref<128x64xf32, #tpu.memory_space<vmem>>, vector<16x32xf32>,
    %c112_25 = arith.constant 112 : index
    %c32 = arith.constant 32 : index
    %76 = vector.load %arg10[%c112_25, %c32] : memref<128x64xf32, #tpu.memory_space<vmem>>, vector<16x32xf32>
    tpu.vector_store %arg10[%c112_25, %c32], %74 {strides = array<i32>} : memref<128x64xf32, #tpu.memory_space<vmem>>, vector<16x32xf32>,
    %77 = tpu.concatenate %45, %74 in 1 : vector<16x32xf32>, vector<16x32xf32> -> vector<16x64xf32>
    %78 = arith.truncf %77 : vector<16x64xf32> to vector<16x64xbf16>
    %cst_26 = arith.constant dense<0.000000e+00> : vector<16x256xf32>
    %79 = tpu.matmul %78, %8, %cst_26 {dimension_numbers = #tpu.dot_dimension_numbers<[1], [0], [0], [1], [0, 0, 1, 1], [], []>} : vector<16x64xbf16>, vector<64x256xbf16>, vector<16x256xf32> -> vector<16x256xf32>
    %c16 = arith.constant 16 : index
    %c0_27 = arith.constant 0 : index
    %80 = vector.load %arg9[%c16, %c0_27] : memref<128x256xf32, #tpu.memory_space<vmem>>, vector<16x256xf32>
    %c96 = arith.constant 96 : index
    %c0_28 = arith.constant 0 : index
    %81 = vector.load %arg9[%c96, %c0_28] : memref<128x256xf32, #tpu.memory_space<vmem>>, vector<16x256xf32>
    %82 = vector.extract_strided_slice %80 {offsets = [0, 0], sizes = [16, 32], strides = [1, 1]} : vector<16x256xf32> to vector<16x32xf32>
    %83 = vector.extract_strided_slice %79 {offsets = [0, 0], sizes = [16, 32], strides = [1, 1]} : vector<16x256xf32> to vector<16x32xf32>
    %84 = arith.addf %82, %83 : vector<16x32xf32>
    %85 = arith.negf %84 : vector<16x32xf32>
    %86 = math.exp %85 : vector<16x32xf32>
    %cst_29 = arith.constant 1.000000e+00 : f32
    %87 = vector.broadcast %cst_29 : f32 to vector<16x32xf32>
    %88 = arith.addf %87, %86 : vector<16x32xf32>
    %89 = arith.divf %87, %88 : vector<16x32xf32>
    %90 = vector.extract_strided_slice %80 {offsets = [0, 32], sizes = [16, 32], strides = [1, 1]} : vector<16x256xf32> to vector<16x32xf32>
    %91 = vector.extract_strided_slice %79 {offsets = [0, 32], sizes = [16, 32], strides = [1, 1]} : vector<16x256xf32> to vector<16x32xf32>
    %92 = arith.addf %90, %91 : vector<16x32xf32>
    %93 = arith.negf %92 : vector<16x32xf32>
    %94 = math.exp %93 : vector<16x32xf32>
    %cst_30 = arith.constant 1.000000e+00 : f32
    %95 = vector.broadcast %cst_30 : f32 to vector<16x32xf32>
    %96 = arith.addf %95, %94 : vector<16x32xf32>
    %97 = arith.divf %95, %96 : vector<16x32xf32>
    %98 = vector.extract_strided_slice %80 {offsets = [0, 64], sizes = [16, 32], strides = [1, 1]} : vector<16x256xf32> to vector<16x32xf32>
    %99 = vector.extract_strided_slice %79 {offsets = [0, 64], sizes = [16, 32], strides = [1, 1]} : vector<16x256xf32> to vector<16x32xf32>
    %100 = vector.broadcast %10 : vector<1x32xf32> to vector<16x32xf32>
    %101 = arith.addf %99, %100 : vector<16x32xf32>
    %102 = arith.mulf %89, %101 : vector<16x32xf32>
    %103 = arith.addf %98, %102 : vector<16x32xf32>
    %104 = math.tanh %103 : vector<16x32xf32>
    %cst_31 = arith.constant 1.000000e+00 : f32
    %105 = vector.broadcast %cst_31 : f32 to vector<16x32xf32>
    %106 = arith.subf %105, %97 : vector<16x32xf32>
    %107 = arith.mulf %106, %104 : vector<16x32xf32>
    %108 = vector.extract_strided_slice %77 {offsets = [0, 0], sizes = [16, 32], strides = [1, 1]} : vector<16x64xf32> to vector<16x32xf32>
    %109 = arith.mulf %97, %108 : vector<16x32xf32>
    %110 = arith.addf %107, %109 : vector<16x32xf32>
    %111 = vector.extract_strided_slice %81 {offsets = [0, 128], sizes = [16, 32], strides = [1, 1]} : vector<16x256xf32> to vector<16x32xf32>
    %112 = vector.extract_strided_slice %79 {offsets = [0, 128], sizes = [16, 32], strides = [1, 1]} : vector<16x256xf32> to vector<16x32xf32>
    %113 = arith.addf %111, %112 : vector<16x32xf32>
    %114 = arith.negf %113 : vector<16x32xf32>
    %115 = math.exp %114 : vector<16x32xf32>
    %cst_32 = arith.constant 1.000000e+00 : f32
    %116 = vector.broadcast %cst_32 : f32 to vector<16x32xf32>
    %117 = arith.addf %116, %115 : vector<16x32xf32>
    %118 = arith.divf %116, %117 : vector<16x32xf32>
    %119 = vector.extract_strided_slice %81 {offsets = [0, 160], sizes = [16, 32], strides = [1, 1]} : vector<16x256xf32> to vector<16x32xf32>
    %120 = vector.extract_strided_slice %79 {offsets = [0, 160], sizes = [16, 32], strides = [1, 1]} : vector<16x256xf32> to vector<16x32xf32>
    %121 = arith.addf %119, %120 : vector<16x32xf32>
    %122 = arith.negf %121 : vector<16x32xf32>
    %123 = math.exp %122 : vector<16x32xf32>
    %cst_33 = arith.constant 1.000000e+00 : f32
    %124 = vector.broadcast %cst_33 : f32 to vector<16x32xf32>
    %125 = arith.addf %124, %123 : vector<16x32xf32>
    %126 = arith.divf %124, %125 : vector<16x32xf32>
    %127 = vector.extract_strided_slice %81 {offsets = [0, 192], sizes = [16, 32], strides = [1, 1]} : vector<16x256xf32> to vector<16x32xf32>
    %128 = vector.extract_strided_slice %79 {offsets = [0, 192], sizes = [16, 32], strides = [1, 1]} : vector<16x256xf32> to vector<16x32xf32>
    %129 = vector.broadcast %11 : vector<1x32xf32> to vector<16x32xf32>
    %130 = arith.addf %128, %129 : vector<16x32xf32>
    %131 = arith.mulf %118, %130 : vector<16x32xf32>
    %132 = arith.addf %127, %131 : vector<16x32xf32>
    %133 = math.tanh %132 : vector<16x32xf32>
    %cst_34 = arith.constant 1.000000e+00 : f32
    %134 = vector.broadcast %cst_34 : f32 to vector<16x32xf32>
    %135 = arith.subf %134, %126 : vector<16x32xf32>
    %136 = arith.mulf %135, %133 : vector<16x32xf32>
    %137 = vector.extract_strided_slice %77 {offsets = [0, 32], sizes = [16, 32], strides = [1, 1]} : vector<16x64xf32> to vector<16x32xf32>
    %138 = arith.mulf %126, %137 : vector<16x32xf32>
    %139 = arith.addf %136, %138 : vector<16x32xf32>
    %c16_35 = arith.constant 16 : index
    %c0_36 = arith.constant 0 : index
    %140 = vector.load %arg10[%c16_35, %c0_36] : memref<128x64xf32, #tpu.memory_space<vmem>>, vector<16x32xf32>
    tpu.vector_store %arg10[%c16_35, %c0_36], %110 {strides = array<i32>} : memref<128x64xf32, #tpu.memory_space<vmem>>, vector<16x32xf32>,
    %c96_37 = arith.constant 96 : index
    %c32_38 = arith.constant 32 : index
    %141 = vector.load %arg10[%c96_37, %c32_38] : memref<128x64xf32, #tpu.memory_space<vmem>>, vector<16x32xf32>
    tpu.vector_store %arg10[%c96_37, %c32_38], %139 {strides = array<i32>} : memref<128x64xf32, #tpu.memory_space<vmem>>, vector<16x32xf32>,
    %142 = tpu.concatenate %110, %139 in 1 : vector<16x32xf32>, vector<16x32xf32> -> vector<16x64xf32>
    %143 = arith.truncf %142 : vector<16x64xf32> to vector<16x64xbf16>
    %cst_39 = arith.constant dense<0.000000e+00> : vector<16x256xf32>
    %144 = tpu.matmul %143, %8, %cst_39 {dimension_numbers = #tpu.dot_dimension_numbers<[1], [0], [0], [1], [0, 0, 1, 1], [], []>} : vector<16x64xbf16>, vector<64x256xbf16>, vector<16x256xf32> -> vector<16x256xf32>
    %c32_40 = arith.constant 32 : index
    %c0_41 = arith.constant 0 : index
    %145 = vector.load %arg9[%c32_40, %c0_41] : memref<128x256xf32, #tpu.memory_space<vmem>>, vector<16x256xf32>
    %c80 = arith.constant 80 : index
    %c0_42 = arith.constant 0 : index
    %146 = vector.load %arg9[%c80, %c0_42] : memref<128x256xf32, #tpu.memory_space<vmem>>, vector<16x256xf32>
    %147 = vector.extract_strided_slice %145 {offsets = [0, 0], sizes = [16, 32], strides = [1, 1]} : vector<16x256xf32> to vector<16x32xf32>
    %148 = vector.extract_strided_slice %144 {offsets = [0, 0], sizes = [16, 32], strides = [1, 1]} : vector<16x256xf32> to vector<16x32xf32>
    %149 = arith.addf %147, %148 : vector<16x32xf32>
    %150 = arith.negf %149 : vector<16x32xf32>
    %151 = math.exp %150 : vector<16x32xf32>
    %cst_43 = arith.constant 1.000000e+00 : f32
    %152 = vector.broadcast %cst_43 : f32 to vector<16x32xf32>
    %153 = arith.addf %152, %151 : vector<16x32xf32>
    %154 = arith.divf %152, %153 : vector<16x32xf32>
    %155 = vector.extract_strided_slice %145 {offsets = [0, 32], sizes = [16, 32], strides = [1, 1]} : vector<16x256xf32> to vector<16x32xf32>
    %156 = vector.extract_strided_slice %144 {offsets = [0, 32], sizes = [16, 32], strides = [1, 1]} : vector<16x256xf32> to vector<16x32xf32>
    %157 = arith.addf %155, %156 : vector<16x32xf32>
    %158 = arith.negf %157 : vector<16x32xf32>
    %159 = math.exp %158 : vector<16x32xf32>
    %cst_44 = arith.constant 1.000000e+00 : f32
    %160 = vector.broadcast %cst_44 : f32 to vector<16x32xf32>
    %161 = arith.addf %160, %159 : vector<16x32xf32>
    %162 = arith.divf %160, %161 : vector<16x32xf32>
    %163 = vector.extract_strided_slice %145 {offsets = [0, 64], sizes = [16, 32], strides = [1, 1]} : vector<16x256xf32> to vector<16x32xf32>
    %164 = vector.extract_strided_slice %144 {offsets = [0, 64], sizes = [16, 32], strides = [1, 1]} : vector<16x256xf32> to vector<16x32xf32>
    %165 = vector.broadcast %10 : vector<1x32xf32> to vector<16x32xf32>
    %166 = arith.addf %164, %165 : vector<16x32xf32>
    %167 = arith.mulf %154, %166 : vector<16x32xf32>
    %168 = arith.addf %163, %167 : vector<16x32xf32>
    %169 = math.tanh %168 : vector<16x32xf32>
    %cst_45 = arith.constant 1.000000e+00 : f32
    %170 = vector.broadcast %cst_45 : f32 to vector<16x32xf32>
    %171 = arith.subf %170, %162 : vector<16x32xf32>
    %172 = arith.mulf %171, %169 : vector<16x32xf32>
    %173 = vector.extract_strided_slice %142 {offsets = [0, 0], sizes = [16, 32], strides = [1, 1]} : vector<16x64xf32> to vector<16x32xf32>
    %174 = arith.mulf %162, %173 : vector<16x32xf32>
    %175 = arith.addf %172, %174 : vector<16x32xf32>
    %176 = vector.extract_strided_slice %146 {offsets = [0, 128], sizes = [16, 32], strides = [1, 1]} : vector<16x256xf32> to vector<16x32xf32>
    %177 = vector.extract_strided_slice %144 {offsets = [0, 128], sizes = [16, 32], strides = [1, 1]} : vector<16x256xf32> to vector<16x32xf32>
    %178 = arith.addf %176, %177 : vector<16x32xf32>
    %179 = arith.negf %178 : vector<16x32xf32>
    %180 = math.exp %179 : vector<16x32xf32>
    %cst_46 = arith.constant 1.000000e+00 : f32
    %181 = vector.broadcast %cst_46 : f32 to vector<16x32xf32>
    %182 = arith.addf %181, %180 : vector<16x32xf32>
    %183 = arith.divf %181, %182 : vector<16x32xf32>
    %184 = vector.extract_strided_slice %146 {offsets = [0, 160], sizes = [16, 32], strides = [1, 1]} : vector<16x256xf32> to vector<16x32xf32>
    %185 = vector.extract_strided_slice %144 {offsets = [0, 160], sizes = [16, 32], strides = [1, 1]} : vector<16x256xf32> to vector<16x32xf32>
    %186 = arith.addf %184, %185 : vector<16x32xf32>
    %187 = arith.negf %186 : vector<16x32xf32>
    %188 = math.exp %187 : vector<16x32xf32>
    %cst_47 = arith.constant 1.000000e+00 : f32
    %189 = vector.broadcast %cst_47 : f32 to vector<16x32xf32>
    %190 = arith.addf %189, %188 : vector<16x32xf32>
    %191 = arith.divf %189, %190 : vector<16x32xf32>
    %192 = vector.extract_strided_slice %146 {offsets = [0, 192], sizes = [16, 32], strides = [1, 1]} : vector<16x256xf32> to vector<16x32xf32>
    %193 = vector.extract_strided_slice %144 {offsets = [0, 192], sizes = [16, 32], strides = [1, 1]} : vector<16x256xf32> to vector<16x32xf32>
    %194 = vector.broadcast %11 : vector<1x32xf32> to vector<16x32xf32>
    %195 = arith.addf %193, %194 : vector<16x32xf32>
    %196 = arith.mulf %183, %195 : vector<16x32xf32>
    %197 = arith.addf %192, %196 : vector<16x32xf32>
    %198 = math.tanh %197 : vector<16x32xf32>
    %cst_48 = arith.constant 1.000000e+00 : f32
    %199 = vector.broadcast %cst_48 : f32 to vector<16x32xf32>
    %200 = arith.subf %199, %191 : vector<16x32xf32>
    %201 = arith.mulf %200, %198 : vector<16x32xf32>
    %202 = vector.extract_strided_slice %142 {offsets = [0, 32], sizes = [16, 32], strides = [1, 1]} : vector<16x64xf32> to vector<16x32xf32>
    %203 = arith.mulf %191, %202 : vector<16x32xf32>
    %204 = arith.addf %201, %203 : vector<16x32xf32>
    %c32_49 = arith.constant 32 : index
    %c0_50 = arith.constant 0 : index
    %205 = vector.load %arg10[%c32_49, %c0_50] : memref<128x64xf32, #tpu.memory_space<vmem>>, vector<16x32xf32>
    tpu.vector_store %arg10[%c32_49, %c0_50], %175 {strides = array<i32>} : memref<128x64xf32, #tpu.memory_space<vmem>>, vector<16x32xf32>,
    %c80_51 = arith.constant 80 : index
    %c32_52 = arith.constant 32 : index
    %206 = vector.load %arg10[%c80_51, %c32_52] : memref<128x64xf32, #tpu.memory_space<vmem>>, vector<16x32xf32>
    tpu.vector_store %arg10[%c80_51, %c32_52], %204 {strides = array<i32>} : memref<128x64xf32, #tpu.memory_space<vmem>>, vector<16x32xf32>,
    %207 = tpu.concatenate %175, %204 in 1 : vector<16x32xf32>, vector<16x32xf32> -> vector<16x64xf32>
    %208 = arith.truncf %207 : vector<16x64xf32> to vector<16x64xbf16>
    %cst_53 = arith.constant dense<0.000000e+00> : vector<16x256xf32>
    %209 = tpu.matmul %208, %8, %cst_53 {dimension_numbers = #tpu.dot_dimension_numbers<[1], [0], [0], [1], [0, 0, 1, 1], [], []>} : vector<16x64xbf16>, vector<64x256xbf16>, vector<16x256xf32> -> vector<16x256xf32>
    %c48 = arith.constant 48 : index
    %c0_54 = arith.constant 0 : index
    %210 = vector.load %arg9[%c48, %c0_54] : memref<128x256xf32, #tpu.memory_space<vmem>>, vector<16x256xf32>
    %c64 = arith.constant 64 : index
    %c0_55 = arith.constant 0 : index
    %211 = vector.load %arg9[%c64, %c0_55] : memref<128x256xf32, #tpu.memory_space<vmem>>, vector<16x256xf32>
    %212 = vector.extract_strided_slice %210 {offsets = [0, 0], sizes = [16, 32], strides = [1, 1]} : vector<16x256xf32> to vector<16x32xf32>
    %213 = vector.extract_strided_slice %209 {offsets = [0, 0], sizes = [16, 32], strides = [1, 1]} : vector<16x256xf32> to vector<16x32xf32>
    %214 = arith.addf %212, %213 : vector<16x32xf32>
    %215 = arith.negf %214 : vector<16x32xf32>
    %216 = math.exp %215 : vector<16x32xf32>
    %cst_56 = arith.constant 1.000000e+00 : f32
    %217 = vector.broadcast %cst_56 : f32 to vector<16x32xf32>
    %218 = arith.addf %217, %216 : vector<16x32xf32>
    %219 = arith.divf %217, %218 : vector<16x32xf32>
    %220 = vector.extract_strided_slice %210 {offsets = [0, 32], sizes = [16, 32], strides = [1, 1]} : vector<16x256xf32> to vector<16x32xf32>
    %221 = vector.extract_strided_slice %209 {offsets = [0, 32], sizes = [16, 32], strides = [1, 1]} : vector<16x256xf32> to vector<16x32xf32>
    %222 = arith.addf %220, %221 : vector<16x32xf32>
    %223 = arith.negf %222 : vector<16x32xf32>
    %224 = math.exp %223 : vector<16x32xf32>
    %cst_57 = arith.constant 1.000000e+00 : f32
    %225 = vector.broadcast %cst_57 : f32 to vector<16x32xf32>
    %226 = arith.addf %225, %224 : vector<16x32xf32>
    %227 = arith.divf %225, %226 : vector<16x32xf32>
    %228 = vector.extract_strided_slice %210 {offsets = [0, 64], sizes = [16, 32], strides = [1, 1]} : vector<16x256xf32> to vector<16x32xf32>
    %229 = vector.extract_strided_slice %209 {offsets = [0, 64], sizes = [16, 32], strides = [1, 1]} : vector<16x256xf32> to vector<16x32xf32>
    %230 = vector.broadcast %10 : vector<1x32xf32> to vector<16x32xf32>
    %231 = arith.addf %229, %230 : vector<16x32xf32>
    %232 = arith.mulf %219, %231 : vector<16x32xf32>
    %233 = arith.addf %228, %232 : vector<16x32xf32>
    %234 = math.tanh %233 : vector<16x32xf32>
    %cst_58 = arith.constant 1.000000e+00 : f32
    %235 = vector.broadcast %cst_58 : f32 to vector<16x32xf32>
    %236 = arith.subf %235, %227 : vector<16x32xf32>
    %237 = arith.mulf %236, %234 : vector<16x32xf32>
    %238 = vector.extract_strided_slice %207 {offsets = [0, 0], sizes = [16, 32], strides = [1, 1]} : vector<16x64xf32> to vector<16x32xf32>
    %239 = arith.mulf %227, %238 : vector<16x32xf32>
    %240 = arith.addf %237, %239 : vector<16x32xf32>
    %241 = vector.extract_strided_slice %211 {offsets = [0, 128], sizes = [16, 32], strides = [1, 1]} : vector<16x256xf32> to vector<16x32xf32>
    %242 = vector.extract_strided_slice %209 {offsets = [0, 128], sizes = [16, 32], strides = [1, 1]} : vector<16x256xf32> to vector<16x32xf32>
    %243 = arith.addf %241, %242 : vector<16x32xf32>
    %244 = arith.negf %243 : vector<16x32xf32>
    %245 = math.exp %244 : vector<16x32xf32>
    %cst_59 = arith.constant 1.000000e+00 : f32
    %246 = vector.broadcast %cst_59 : f32 to vector<16x32xf32>
    %247 = arith.addf %246, %245 : vector<16x32xf32>
    %248 = arith.divf %246, %247 : vector<16x32xf32>
    %249 = vector.extract_strided_slice %211 {offsets = [0, 160], sizes = [16, 32], strides = [1, 1]} : vector<16x256xf32> to vector<16x32xf32>
    %250 = vector.extract_strided_slice %209 {offsets = [0, 160], sizes = [16, 32], strides = [1, 1]} : vector<16x256xf32> to vector<16x32xf32>
    %251 = arith.addf %249, %250 : vector<16x32xf32>
    %252 = arith.negf %251 : vector<16x32xf32>
    %253 = math.exp %252 : vector<16x32xf32>
    %cst_60 = arith.constant 1.000000e+00 : f32
    %254 = vector.broadcast %cst_60 : f32 to vector<16x32xf32>
    %255 = arith.addf %254, %253 : vector<16x32xf32>
    %256 = arith.divf %254, %255 : vector<16x32xf32>
    %257 = vector.extract_strided_slice %211 {offsets = [0, 192], sizes = [16, 32], strides = [1, 1]} : vector<16x256xf32> to vector<16x32xf32>
    %258 = vector.extract_strided_slice %209 {offsets = [0, 192], sizes = [16, 32], strides = [1, 1]} : vector<16x256xf32> to vector<16x32xf32>
    %259 = vector.broadcast %11 : vector<1x32xf32> to vector<16x32xf32>
    %260 = arith.addf %258, %259 : vector<16x32xf32>
    %261 = arith.mulf %248, %260 : vector<16x32xf32>
    %262 = arith.addf %257, %261 : vector<16x32xf32>
    %263 = math.tanh %262 : vector<16x32xf32>
    %cst_61 = arith.constant 1.000000e+00 : f32
    %264 = vector.broadcast %cst_61 : f32 to vector<16x32xf32>
    %265 = arith.subf %264, %256 : vector<16x32xf32>
    %266 = arith.mulf %265, %263 : vector<16x32xf32>
    %267 = vector.extract_strided_slice %207 {offsets = [0, 32], sizes = [16, 32], strides = [1, 1]} : vector<16x64xf32> to vector<16x32xf32>
    %268 = arith.mulf %256, %267 : vector<16x32xf32>
    %269 = arith.addf %266, %268 : vector<16x32xf32>
    %c48_62 = arith.constant 48 : index
    %c0_63 = arith.constant 0 : index
    %270 = vector.load %arg10[%c48_62, %c0_63] : memref<128x64xf32, #tpu.memory_space<vmem>>, vector<16x32xf32>
    tpu.vector_store %arg10[%c48_62, %c0_63], %240 {strides = array<i32>} : memref<128x64xf32, #tpu.memory_space<vmem>>, vector<16x32xf32>,
    %c64_64 = arith.constant 64 : index
    %c32_65 = arith.constant 32 : index
    %271 = vector.load %arg10[%c64_64, %c32_65] : memref<128x64xf32, #tpu.memory_space<vmem>>, vector<16x32xf32>
    tpu.vector_store %arg10[%c64_64, %c32_65], %269 {strides = array<i32>} : memref<128x64xf32, #tpu.memory_space<vmem>>, vector<16x32xf32>,
    %272 = tpu.concatenate %240, %269 in 1 : vector<16x32xf32>, vector<16x32xf32> -> vector<16x64xf32>
    %273 = arith.truncf %272 : vector<16x64xf32> to vector<16x64xbf16>
    %cst_66 = arith.constant dense<0.000000e+00> : vector<16x256xf32>
    %274 = tpu.matmul %273, %8, %cst_66 {dimension_numbers = #tpu.dot_dimension_numbers<[1], [0], [0], [1], [0, 0, 1, 1], [], []>} : vector<16x64xbf16>, vector<64x256xbf16>, vector<16x256xf32> -> vector<16x256xf32>
    %c64_67 = arith.constant 64 : index
    %c0_68 = arith.constant 0 : index
    %275 = vector.load %arg9[%c64_67, %c0_68] : memref<128x256xf32, #tpu.memory_space<vmem>>, vector<16x256xf32>
    %c48_69 = arith.constant 48 : index
    %c0_70 = arith.constant 0 : index
    %276 = vector.load %arg9[%c48_69, %c0_70] : memref<128x256xf32, #tpu.memory_space<vmem>>, vector<16x256xf32>
    %277 = vector.extract_strided_slice %275 {offsets = [0, 0], sizes = [16, 32], strides = [1, 1]} : vector<16x256xf32> to vector<16x32xf32>
    %278 = vector.extract_strided_slice %274 {offsets = [0, 0], sizes = [16, 32], strides = [1, 1]} : vector<16x256xf32> to vector<16x32xf32>
    %279 = arith.addf %277, %278 : vector<16x32xf32>
    %280 = arith.negf %279 : vector<16x32xf32>
    %281 = math.exp %280 : vector<16x32xf32>
    %cst_71 = arith.constant 1.000000e+00 : f32
    %282 = vector.broadcast %cst_71 : f32 to vector<16x32xf32>
    %283 = arith.addf %282, %281 : vector<16x32xf32>
    %284 = arith.divf %282, %283 : vector<16x32xf32>
    %285 = vector.extract_strided_slice %275 {offsets = [0, 32], sizes = [16, 32], strides = [1, 1]} : vector<16x256xf32> to vector<16x32xf32>
    %286 = vector.extract_strided_slice %274 {offsets = [0, 32], sizes = [16, 32], strides = [1, 1]} : vector<16x256xf32> to vector<16x32xf32>
    %287 = arith.addf %285, %286 : vector<16x32xf32>
    %288 = arith.negf %287 : vector<16x32xf32>
    %289 = math.exp %288 : vector<16x32xf32>
    %cst_72 = arith.constant 1.000000e+00 : f32
    %290 = vector.broadcast %cst_72 : f32 to vector<16x32xf32>
    %291 = arith.addf %290, %289 : vector<16x32xf32>
    %292 = arith.divf %290, %291 : vector<16x32xf32>
    %293 = vector.extract_strided_slice %275 {offsets = [0, 64], sizes = [16, 32], strides = [1, 1]} : vector<16x256xf32> to vector<16x32xf32>
    %294 = vector.extract_strided_slice %274 {offsets = [0, 64], sizes = [16, 32], strides = [1, 1]} : vector<16x256xf32> to vector<16x32xf32>
    %295 = vector.broadcast %10 : vector<1x32xf32> to vector<16x32xf32>
    %296 = arith.addf %294, %295 : vector<16x32xf32>
    %297 = arith.mulf %284, %296 : vector<16x32xf32>
    %298 = arith.addf %293, %297 : vector<16x32xf32>
    %299 = math.tanh %298 : vector<16x32xf32>
    %cst_73 = arith.constant 1.000000e+00 : f32
    %300 = vector.broadcast %cst_73 : f32 to vector<16x32xf32>
    %301 = arith.subf %300, %292 : vector<16x32xf32>
    %302 = arith.mulf %301, %299 : vector<16x32xf32>
    %303 = vector.extract_strided_slice %272 {offsets = [0, 0], sizes = [16, 32], strides = [1, 1]} : vector<16x64xf32> to vector<16x32xf32>
    %304 = arith.mulf %292, %303 : vector<16x32xf32>
    %305 = arith.addf %302, %304 : vector<16x32xf32>
    %306 = vector.extract_strided_slice %276 {offsets = [0, 128], sizes = [16, 32], strides = [1, 1]} : vector<16x256xf32> to vector<16x32xf32>
    %307 = vector.extract_strided_slice %274 {offsets = [0, 128], sizes = [16, 32], strides = [1, 1]} : vector<16x256xf32> to vector<16x32xf32>
    %308 = arith.addf %306, %307 : vector<16x32xf32>
    %309 = arith.negf %308 : vector<16x32xf32>
    %310 = math.exp %309 : vector<16x32xf32>
    %cst_74 = arith.constant 1.000000e+00 : f32
    %311 = vector.broadcast %cst_74 : f32 to vector<16x32xf32>
    %312 = arith.addf %311, %310 : vector<16x32xf32>
    %313 = arith.divf %311, %312 : vector<16x32xf32>
    %314 = vector.extract_strided_slice %276 {offsets = [0, 160], sizes = [16, 32], strides = [1, 1]} : vector<16x256xf32> to vector<16x32xf32>
    %315 = vector.extract_strided_slice %274 {offsets = [0, 160], sizes = [16, 32], strides = [1, 1]} : vector<16x256xf32> to vector<16x32xf32>
    %316 = arith.addf %314, %315 : vector<16x32xf32>
    %317 = arith.negf %316 : vector<16x32xf32>
    %318 = math.exp %317 : vector<16x32xf32>
    %cst_75 = arith.constant 1.000000e+00 : f32
    %319 = vector.broadcast %cst_75 : f32 to vector<16x32xf32>
    %320 = arith.addf %319, %318 : vector<16x32xf32>
    %321 = arith.divf %319, %320 : vector<16x32xf32>
    %322 = vector.extract_strided_slice %276 {offsets = [0, 192], sizes = [16, 32], strides = [1, 1]} : vector<16x256xf32> to vector<16x32xf32>
    %323 = vector.extract_strided_slice %274 {offsets = [0, 192], sizes = [16, 32], strides = [1, 1]} : vector<16x256xf32> to vector<16x32xf32>
    %324 = vector.broadcast %11 : vector<1x32xf32> to vector<16x32xf32>
    %325 = arith.addf %323, %324 : vector<16x32xf32>
    %326 = arith.mulf %313, %325 : vector<16x32xf32>
    %327 = arith.addf %322, %326 : vector<16x32xf32>
    %328 = math.tanh %327 : vector<16x32xf32>
    %cst_76 = arith.constant 1.000000e+00 : f32
    %329 = vector.broadcast %cst_76 : f32 to vector<16x32xf32>
    %330 = arith.subf %329, %321 : vector<16x32xf32>
    %331 = arith.mulf %330, %328 : vector<16x32xf32>
    %332 = vector.extract_strided_slice %272 {offsets = [0, 32], sizes = [16, 32], strides = [1, 1]} : vector<16x64xf32> to vector<16x32xf32>
    %333 = arith.mulf %321, %332 : vector<16x32xf32>
    %334 = arith.addf %331, %333 : vector<16x32xf32>
    %c64_77 = arith.constant 64 : index
    %c0_78 = arith.constant 0 : index
    %335 = vector.load %arg10[%c64_77, %c0_78] : memref<128x64xf32, #tpu.memory_space<vmem>>, vector<16x32xf32>
    tpu.vector_store %arg10[%c64_77, %c0_78], %305 {strides = array<i32>} : memref<128x64xf32, #tpu.memory_space<vmem>>, vector<16x32xf32>,
    %c48_79 = arith.constant 48 : index
    %c32_80 = arith.constant 32 : index
    %336 = vector.load %arg10[%c48_79, %c32_80] : memref<128x64xf32, #tpu.memory_space<vmem>>, vector<16x32xf32>
    tpu.vector_store %arg10[%c48_79, %c32_80], %334 {strides = array<i32>} : memref<128x64xf32, #tpu.memory_space<vmem>>, vector<16x32xf32>,
    %337 = tpu.concatenate %305, %334 in 1 : vector<16x32xf32>, vector<16x32xf32> -> vector<16x64xf32>
    %338 = arith.truncf %337 : vector<16x64xf32> to vector<16x64xbf16>
    %cst_81 = arith.constant dense<0.000000e+00> : vector<16x256xf32>
    %339 = tpu.matmul %338, %8, %cst_81 {dimension_numbers = #tpu.dot_dimension_numbers<[1], [0], [0], [1], [0, 0, 1, 1], [], []>} : vector<16x64xbf16>, vector<64x256xbf16>, vector<16x256xf32> -> vector<16x256xf32>
    %c80_82 = arith.constant 80 : index
    %c0_83 = arith.constant 0 : index
    %340 = vector.load %arg9[%c80_82, %c0_83] : memref<128x256xf32, #tpu.memory_space<vmem>>, vector<16x256xf32>
    %c32_84 = arith.constant 32 : index
    %c0_85 = arith.constant 0 : index
    %341 = vector.load %arg9[%c32_84, %c0_85] : memref<128x256xf32, #tpu.memory_space<vmem>>, vector<16x256xf32>
    %342 = vector.extract_strided_slice %340 {offsets = [0, 0], sizes = [16, 32], strides = [1, 1]} : vector<16x256xf32> to vector<16x32xf32>
    %343 = vector.extract_strided_slice %339 {offsets = [0, 0], sizes = [16, 32], strides = [1, 1]} : vector<16x256xf32> to vector<16x32xf32>
    %344 = arith.addf %342, %343 : vector<16x32xf32>
    %345 = arith.negf %344 : vector<16x32xf32>
    %346 = math.exp %345 : vector<16x32xf32>
    %cst_86 = arith.constant 1.000000e+00 : f32
    %347 = vector.broadcast %cst_86 : f32 to vector<16x32xf32>
    %348 = arith.addf %347, %346 : vector<16x32xf32>
    %349 = arith.divf %347, %348 : vector<16x32xf32>
    %350 = vector.extract_strided_slice %340 {offsets = [0, 32], sizes = [16, 32], strides = [1, 1]} : vector<16x256xf32> to vector<16x32xf32>
    %351 = vector.extract_strided_slice %339 {offsets = [0, 32], sizes = [16, 32], strides = [1, 1]} : vector<16x256xf32> to vector<16x32xf32>
    %352 = arith.addf %350, %351 : vector<16x32xf32>
    %353 = arith.negf %352 : vector<16x32xf32>
    %354 = math.exp %353 : vector<16x32xf32>
    %cst_87 = arith.constant 1.000000e+00 : f32
    %355 = vector.broadcast %cst_87 : f32 to vector<16x32xf32>
    %356 = arith.addf %355, %354 : vector<16x32xf32>
    %357 = arith.divf %355, %356 : vector<16x32xf32>
    %358 = vector.extract_strided_slice %340 {offsets = [0, 64], sizes = [16, 32], strides = [1, 1]} : vector<16x256xf32> to vector<16x32xf32>
    %359 = vector.extract_strided_slice %339 {offsets = [0, 64], sizes = [16, 32], strides = [1, 1]} : vector<16x256xf32> to vector<16x32xf32>
    %360 = vector.broadcast %10 : vector<1x32xf32> to vector<16x32xf32>
    %361 = arith.addf %359, %360 : vector<16x32xf32>
    %362 = arith.mulf %349, %361 : vector<16x32xf32>
    %363 = arith.addf %358, %362 : vector<16x32xf32>
    %364 = math.tanh %363 : vector<16x32xf32>
    %cst_88 = arith.constant 1.000000e+00 : f32
    %365 = vector.broadcast %cst_88 : f32 to vector<16x32xf32>
    %366 = arith.subf %365, %357 : vector<16x32xf32>
    %367 = arith.mulf %366, %364 : vector<16x32xf32>
    %368 = vector.extract_strided_slice %337 {offsets = [0, 0], sizes = [16, 32], strides = [1, 1]} : vector<16x64xf32> to vector<16x32xf32>
    %369 = arith.mulf %357, %368 : vector<16x32xf32>
    %370 = arith.addf %367, %369 : vector<16x32xf32>
    %371 = vector.extract_strided_slice %341 {offsets = [0, 128], sizes = [16, 32], strides = [1, 1]} : vector<16x256xf32> to vector<16x32xf32>
    %372 = vector.extract_strided_slice %339 {offsets = [0, 128], sizes = [16, 32], strides = [1, 1]} : vector<16x256xf32> to vector<16x32xf32>
    %373 = arith.addf %371, %372 : vector<16x32xf32>
    %374 = arith.negf %373 : vector<16x32xf32>
    %375 = math.exp %374 : vector<16x32xf32>
    %cst_89 = arith.constant 1.000000e+00 : f32
    %376 = vector.broadcast %cst_89 : f32 to vector<16x32xf32>
    %377 = arith.addf %376, %375 : vector<16x32xf32>
    %378 = arith.divf %376, %377 : vector<16x32xf32>
    %379 = vector.extract_strided_slice %341 {offsets = [0, 160], sizes = [16, 32], strides = [1, 1]} : vector<16x256xf32> to vector<16x32xf32>
    %380 = vector.extract_strided_slice %339 {offsets = [0, 160], sizes = [16, 32], strides = [1, 1]} : vector<16x256xf32> to vector<16x32xf32>
    %381 = arith.addf %379, %380 : vector<16x32xf32>
    %382 = arith.negf %381 : vector<16x32xf32>
    %383 = math.exp %382 : vector<16x32xf32>
    %cst_90 = arith.constant 1.000000e+00 : f32
    %384 = vector.broadcast %cst_90 : f32 to vector<16x32xf32>
    %385 = arith.addf %384, %383 : vector<16x32xf32>
    %386 = arith.divf %384, %385 : vector<16x32xf32>
    %387 = vector.extract_strided_slice %341 {offsets = [0, 192], sizes = [16, 32], strides = [1, 1]} : vector<16x256xf32> to vector<16x32xf32>
    %388 = vector.extract_strided_slice %339 {offsets = [0, 192], sizes = [16, 32], strides = [1, 1]} : vector<16x256xf32> to vector<16x32xf32>
    %389 = vector.broadcast %11 : vector<1x32xf32> to vector<16x32xf32>
    %390 = arith.addf %388, %389 : vector<16x32xf32>
    %391 = arith.mulf %378, %390 : vector<16x32xf32>
    %392 = arith.addf %387, %391 : vector<16x32xf32>
    %393 = math.tanh %392 : vector<16x32xf32>
    %cst_91 = arith.constant 1.000000e+00 : f32
    %394 = vector.broadcast %cst_91 : f32 to vector<16x32xf32>
    %395 = arith.subf %394, %386 : vector<16x32xf32>
    %396 = arith.mulf %395, %393 : vector<16x32xf32>
    %397 = vector.extract_strided_slice %337 {offsets = [0, 32], sizes = [16, 32], strides = [1, 1]} : vector<16x64xf32> to vector<16x32xf32>
    %398 = arith.mulf %386, %397 : vector<16x32xf32>
    %399 = arith.addf %396, %398 : vector<16x32xf32>
    %c80_92 = arith.constant 80 : index
    %c0_93 = arith.constant 0 : index
    %400 = vector.load %arg10[%c80_92, %c0_93] : memref<128x64xf32, #tpu.memory_space<vmem>>, vector<16x32xf32>
    tpu.vector_store %arg10[%c80_92, %c0_93], %370 {strides = array<i32>} : memref<128x64xf32, #tpu.memory_space<vmem>>, vector<16x32xf32>,
    %c32_94 = arith.constant 32 : index
    %c32_95 = arith.constant 32 : index
    %401 = vector.load %arg10[%c32_94, %c32_95] : memref<128x64xf32, #tpu.memory_space<vmem>>, vector<16x32xf32>
    tpu.vector_store %arg10[%c32_94, %c32_95], %399 {strides = array<i32>} : memref<128x64xf32, #tpu.memory_space<vmem>>, vector<16x32xf32>,
    %402 = tpu.concatenate %370, %399 in 1 : vector<16x32xf32>, vector<16x32xf32> -> vector<16x64xf32>
    %403 = arith.truncf %402 : vector<16x64xf32> to vector<16x64xbf16>
    %cst_96 = arith.constant dense<0.000000e+00> : vector<16x256xf32>
    %404 = tpu.matmul %403, %8, %cst_96 {dimension_numbers = #tpu.dot_dimension_numbers<[1], [0], [0], [1], [0, 0, 1, 1], [], []>} : vector<16x64xbf16>, vector<64x256xbf16>, vector<16x256xf32> -> vector<16x256xf32>
    %c96_97 = arith.constant 96 : index
    %c0_98 = arith.constant 0 : index
    %405 = vector.load %arg9[%c96_97, %c0_98] : memref<128x256xf32, #tpu.memory_space<vmem>>, vector<16x256xf32>
    %c16_99 = arith.constant 16 : index
    %c0_100 = arith.constant 0 : index
    %406 = vector.load %arg9[%c16_99, %c0_100] : memref<128x256xf32, #tpu.memory_space<vmem>>, vector<16x256xf32>
    %407 = vector.extract_strided_slice %405 {offsets = [0, 0], sizes = [16, 32], strides = [1, 1]} : vector<16x256xf32> to vector<16x32xf32>
    %408 = vector.extract_strided_slice %404 {offsets = [0, 0], sizes = [16, 32], strides = [1, 1]} : vector<16x256xf32> to vector<16x32xf32>
    %409 = arith.addf %407, %408 : vector<16x32xf32>
    %410 = arith.negf %409 : vector<16x32xf32>
    %411 = math.exp %410 : vector<16x32xf32>
    %cst_101 = arith.constant 1.000000e+00 : f32
    %412 = vector.broadcast %cst_101 : f32 to vector<16x32xf32>
    %413 = arith.addf %412, %411 : vector<16x32xf32>
    %414 = arith.divf %412, %413 : vector<16x32xf32>
    %415 = vector.extract_strided_slice %405 {offsets = [0, 32], sizes = [16, 32], strides = [1, 1]} : vector<16x256xf32> to vector<16x32xf32>
    %416 = vector.extract_strided_slice %404 {offsets = [0, 32], sizes = [16, 32], strides = [1, 1]} : vector<16x256xf32> to vector<16x32xf32>
    %417 = arith.addf %415, %416 : vector<16x32xf32>
    %418 = arith.negf %417 : vector<16x32xf32>
    %419 = math.exp %418 : vector<16x32xf32>
    %cst_102 = arith.constant 1.000000e+00 : f32
    %420 = vector.broadcast %cst_102 : f32 to vector<16x32xf32>
    %421 = arith.addf %420, %419 : vector<16x32xf32>
    %422 = arith.divf %420, %421 : vector<16x32xf32>
    %423 = vector.extract_strided_slice %405 {offsets = [0, 64], sizes = [16, 32], strides = [1, 1]} : vector<16x256xf32> to vector<16x32xf32>
    %424 = vector.extract_strided_slice %404 {offsets = [0, 64], sizes = [16, 32], strides = [1, 1]} : vector<16x256xf32> to vector<16x32xf32>
    %425 = vector.broadcast %10 : vector<1x32xf32> to vector<16x32xf32>
    %426 = arith.addf %424, %425 : vector<16x32xf32>
    %427 = arith.mulf %414, %426 : vector<16x32xf32>
    %428 = arith.addf %423, %427 : vector<16x32xf32>
    %429 = math.tanh %428 : vector<16x32xf32>
    %cst_103 = arith.constant 1.000000e+00 : f32
    %430 = vector.broadcast %cst_103 : f32 to vector<16x32xf32>
    %431 = arith.subf %430, %422 : vector<16x32xf32>
    %432 = arith.mulf %431, %429 : vector<16x32xf32>
    %433 = vector.extract_strided_slice %402 {offsets = [0, 0], sizes = [16, 32], strides = [1, 1]} : vector<16x64xf32> to vector<16x32xf32>
    %434 = arith.mulf %422, %433 : vector<16x32xf32>
    %435 = arith.addf %432, %434 : vector<16x32xf32>
    %436 = vector.extract_strided_slice %406 {offsets = [0, 128], sizes = [16, 32], strides = [1, 1]} : vector<16x256xf32> to vector<16x32xf32>
    %437 = vector.extract_strided_slice %404 {offsets = [0, 128], sizes = [16, 32], strides = [1, 1]} : vector<16x256xf32> to vector<16x32xf32>
    %438 = arith.addf %436, %437 : vector<16x32xf32>
    %439 = arith.negf %438 : vector<16x32xf32>
    %440 = math.exp %439 : vector<16x32xf32>
    %cst_104 = arith.constant 1.000000e+00 : f32
    %441 = vector.broadcast %cst_104 : f32 to vector<16x32xf32>
    %442 = arith.addf %441, %440 : vector<16x32xf32>
    %443 = arith.divf %441, %442 : vector<16x32xf32>
    %444 = vector.extract_strided_slice %406 {offsets = [0, 160], sizes = [16, 32], strides = [1, 1]} : vector<16x256xf32> to vector<16x32xf32>
    %445 = vector.extract_strided_slice %404 {offsets = [0, 160], sizes = [16, 32], strides = [1, 1]} : vector<16x256xf32> to vector<16x32xf32>
    %446 = arith.addf %444, %445 : vector<16x32xf32>
    %447 = arith.negf %446 : vector<16x32xf32>
    %448 = math.exp %447 : vector<16x32xf32>
    %cst_105 = arith.constant 1.000000e+00 : f32
    %449 = vector.broadcast %cst_105 : f32 to vector<16x32xf32>
    %450 = arith.addf %449, %448 : vector<16x32xf32>
    %451 = arith.divf %449, %450 : vector<16x32xf32>
    %452 = vector.extract_strided_slice %406 {offsets = [0, 192], sizes = [16, 32], strides = [1, 1]} : vector<16x256xf32> to vector<16x32xf32>
    %453 = vector.extract_strided_slice %404 {offsets = [0, 192], sizes = [16, 32], strides = [1, 1]} : vector<16x256xf32> to vector<16x32xf32>
    %454 = vector.broadcast %11 : vector<1x32xf32> to vector<16x32xf32>
    %455 = arith.addf %453, %454 : vector<16x32xf32>
    %456 = arith.mulf %443, %455 : vector<16x32xf32>
    %457 = arith.addf %452, %456 : vector<16x32xf32>
    %458 = math.tanh %457 : vector<16x32xf32>
    %cst_106 = arith.constant 1.000000e+00 : f32
    %459 = vector.broadcast %cst_106 : f32 to vector<16x32xf32>
    %460 = arith.subf %459, %451 : vector<16x32xf32>
    %461 = arith.mulf %460, %458 : vector<16x32xf32>
    %462 = vector.extract_strided_slice %402 {offsets = [0, 32], sizes = [16, 32], strides = [1, 1]} : vector<16x64xf32> to vector<16x32xf32>
    %463 = arith.mulf %451, %462 : vector<16x32xf32>
    %464 = arith.addf %461, %463 : vector<16x32xf32>
    %c96_107 = arith.constant 96 : index
    %c0_108 = arith.constant 0 : index
    %465 = vector.load %arg10[%c96_107, %c0_108] : memref<128x64xf32, #tpu.memory_space<vmem>>, vector<16x32xf32>
    tpu.vector_store %arg10[%c96_107, %c0_108], %435 {strides = array<i32>} : memref<128x64xf32, #tpu.memory_space<vmem>>, vector<16x32xf32>,
    %c16_109 = arith.constant 16 : index
    %c32_110 = arith.constant 32 : index
    %466 = vector.load %arg10[%c16_109, %c32_110] : memref<128x64xf32, #tpu.memory_space<vmem>>, vector<16x32xf32>
    tpu.vector_store %arg10[%c16_109, %c32_110], %464 {strides = array<i32>} : memref<128x64xf32, #tpu.memory_space<vmem>>, vector<16x32xf32>,
    %467 = tpu.concatenate %435, %464 in 1 : vector<16x32xf32>, vector<16x32xf32> -> vector<16x64xf32>
    %468 = arith.truncf %467 : vector<16x64xf32> to vector<16x64xbf16>
    %cst_111 = arith.constant dense<0.000000e+00> : vector<16x256xf32>
    %469 = tpu.matmul %468, %8, %cst_111 {dimension_numbers = #tpu.dot_dimension_numbers<[1], [0], [0], [1], [0, 0, 1, 1], [], []>} : vector<16x64xbf16>, vector<64x256xbf16>, vector<16x256xf32> -> vector<16x256xf32>
    %c112_112 = arith.constant 112 : index
    %c0_113 = arith.constant 0 : index
    %470 = vector.load %arg9[%c112_112, %c0_113] : memref<128x256xf32, #tpu.memory_space<vmem>>, vector<16x256xf32>
    %c0_114 = arith.constant 0 : index
    %c0_115 = arith.constant 0 : index
    %471 = vector.load %arg9[%c0_114, %c0_115] : memref<128x256xf32, #tpu.memory_space<vmem>>, vector<16x256xf32>
    %472 = vector.extract_strided_slice %470 {offsets = [0, 0], sizes = [16, 32], strides = [1, 1]} : vector<16x256xf32> to vector<16x32xf32>
    %473 = vector.extract_strided_slice %469 {offsets = [0, 0], sizes = [16, 32], strides = [1, 1]} : vector<16x256xf32> to vector<16x32xf32>
    %474 = arith.addf %472, %473 : vector<16x32xf32>
    %475 = arith.negf %474 : vector<16x32xf32>
    %476 = math.exp %475 : vector<16x32xf32>
    %cst_116 = arith.constant 1.000000e+00 : f32
    %477 = vector.broadcast %cst_116 : f32 to vector<16x32xf32>
    %478 = arith.addf %477, %476 : vector<16x32xf32>
    %479 = arith.divf %477, %478 : vector<16x32xf32>
    %480 = vector.extract_strided_slice %470 {offsets = [0, 32], sizes = [16, 32], strides = [1, 1]} : vector<16x256xf32> to vector<16x32xf32>
    %481 = vector.extract_strided_slice %469 {offsets = [0, 32], sizes = [16, 32], strides = [1, 1]} : vector<16x256xf32> to vector<16x32xf32>
    %482 = arith.addf %480, %481 : vector<16x32xf32>
    %483 = arith.negf %482 : vector<16x32xf32>
    %484 = math.exp %483 : vector<16x32xf32>
    %cst_117 = arith.constant 1.000000e+00 : f32
    %485 = vector.broadcast %cst_117 : f32 to vector<16x32xf32>
    %486 = arith.addf %485, %484 : vector<16x32xf32>
    %487 = arith.divf %485, %486 : vector<16x32xf32>
    %488 = vector.extract_strided_slice %470 {offsets = [0, 64], sizes = [16, 32], strides = [1, 1]} : vector<16x256xf32> to vector<16x32xf32>
    %489 = vector.extract_strided_slice %469 {offsets = [0, 64], sizes = [16, 32], strides = [1, 1]} : vector<16x256xf32> to vector<16x32xf32>
    %490 = vector.broadcast %10 : vector<1x32xf32> to vector<16x32xf32>
    %491 = arith.addf %489, %490 : vector<16x32xf32>
    %492 = arith.mulf %479, %491 : vector<16x32xf32>
    %493 = arith.addf %488, %492 : vector<16x32xf32>
    %494 = math.tanh %493 : vector<16x32xf32>
    %cst_118 = arith.constant 1.000000e+00 : f32
    %495 = vector.broadcast %cst_118 : f32 to vector<16x32xf32>
    %496 = arith.subf %495, %487 : vector<16x32xf32>
    %497 = arith.mulf %496, %494 : vector<16x32xf32>
    %498 = vector.extract_strided_slice %467 {offsets = [0, 0], sizes = [16, 32], strides = [1, 1]} : vector<16x64xf32> to vector<16x32xf32>
    %499 = arith.mulf %487, %498 : vector<16x32xf32>
    %500 = arith.addf %497, %499 : vector<16x32xf32>
    %501 = vector.extract_strided_slice %471 {offsets = [0, 128], sizes = [16, 32], strides = [1, 1]} : vector<16x256xf32> to vector<16x32xf32>
    %502 = vector.extract_strided_slice %469 {offsets = [0, 128], sizes = [16, 32], strides = [1, 1]} : vector<16x256xf32> to vector<16x32xf32>
    %503 = arith.addf %501, %502 : vector<16x32xf32>
    %504 = arith.negf %503 : vector<16x32xf32>
    %505 = math.exp %504 : vector<16x32xf32>
    %cst_119 = arith.constant 1.000000e+00 : f32
    %506 = vector.broadcast %cst_119 : f32 to vector<16x32xf32>
    %507 = arith.addf %506, %505 : vector<16x32xf32>
    %508 = arith.divf %506, %507 : vector<16x32xf32>
    %509 = vector.extract_strided_slice %471 {offsets = [0, 160], sizes = [16, 32], strides = [1, 1]} : vector<16x256xf32> to vector<16x32xf32>
    %510 = vector.extract_strided_slice %469 {offsets = [0, 160], sizes = [16, 32], strides = [1, 1]} : vector<16x256xf32> to vector<16x32xf32>
    %511 = arith.addf %509, %510 : vector<16x32xf32>
    %512 = arith.negf %511 : vector<16x32xf32>
    %513 = math.exp %512 : vector<16x32xf32>
    %cst_120 = arith.constant 1.000000e+00 : f32
    %514 = vector.broadcast %cst_120 : f32 to vector<16x32xf32>
    %515 = arith.addf %514, %513 : vector<16x32xf32>
    %516 = arith.divf %514, %515 : vector<16x32xf32>
    %517 = vector.extract_strided_slice %471 {offsets = [0, 192], sizes = [16, 32], strides = [1, 1]} : vector<16x256xf32> to vector<16x32xf32>
    %518 = vector.extract_strided_slice %469 {offsets = [0, 192], sizes = [16, 32], strides = [1, 1]} : vector<16x256xf32> to vector<16x32xf32>
    %519 = vector.broadcast %11 : vector<1x32xf32> to vector<16x32xf32>
    %520 = arith.addf %518, %519 : vector<16x32xf32>
    %521 = arith.mulf %508, %520 : vector<16x32xf32>
    %522 = arith.addf %517, %521 : vector<16x32xf32>
    %523 = math.tanh %522 : vector<16x32xf32>
    %cst_121 = arith.constant 1.000000e+00 : f32
    %524 = vector.broadcast %cst_121 : f32 to vector<16x32xf32>
    %525 = arith.subf %524, %516 : vector<16x32xf32>
    %526 = arith.mulf %525, %523 : vector<16x32xf32>
    %527 = vector.extract_strided_slice %467 {offsets = [0, 32], sizes = [16, 32], strides = [1, 1]} : vector<16x64xf32> to vector<16x32xf32>
    %528 = arith.mulf %516, %527 : vector<16x32xf32>
    %529 = arith.addf %526, %528 : vector<16x32xf32>
    %c112_122 = arith.constant 112 : index
    %c0_123 = arith.constant 0 : index
    %530 = vector.load %arg10[%c112_122, %c0_123] : memref<128x64xf32, #tpu.memory_space<vmem>>, vector<16x32xf32>
    tpu.vector_store %arg10[%c112_122, %c0_123], %500 {strides = array<i32>} : memref<128x64xf32, #tpu.memory_space<vmem>>, vector<16x32xf32>,
    %c0_124 = arith.constant 0 : index
    %c32_125 = arith.constant 32 : index
    %531 = vector.load %arg10[%c0_124, %c32_125] : memref<128x64xf32, #tpu.memory_space<vmem>>, vector<16x32xf32>
    tpu.vector_store %arg10[%c0_124, %c32_125], %529 {strides = array<i32>} : memref<128x64xf32, #tpu.memory_space<vmem>>, vector<16x32xf32>,
    %c0_126 = arith.constant 0 : index
    %c0_127 = arith.constant 0 : index
    %532 = vector.load %arg10[%c0_126, %c0_127] : memref<128x64xf32, #tpu.memory_space<vmem>>, vector<128x64xf32>
    %533 = arith.truncf %532 : vector<128x64xf32> to vector<128x64xbf16>
    %c0_128 = arith.constant 0 : index
    %c0_129 = arith.constant 0 : index
    %534 = vector.load %arg6[%c0_128, %c0_129] : memref<64x128xbf16, #tpu.memory_space<vmem>>, vector<64x128xbf16>
    %cst_130 = arith.constant dense<0.000000e+00> : vector<128x128xf32>
    %535 = tpu.matmul %533, %534, %cst_130 {dimension_numbers = #tpu.dot_dimension_numbers<[1], [0], [0], [1], [0, 0, 1, 1], [], []>} : vector<128x64xbf16>, vector<64x128xbf16>, vector<128x128xf32> -> vector<128x128xf32>
    %c0_131 = arith.constant 0 : index
    %c0_132 = arith.constant 0 : index
    %536 = vector.load %arg7[%c0_131, %c0_132] : memref<1x128xf32, #tpu.memory_space<vmem>>, vector<1x128xf32>
    %537 = vector.broadcast %536 : vector<1x128xf32> to vector<128x128xf32>
    %538 = arith.addf %535, %537 : vector<128x128xf32>
    %539 = vector.shape_cast %538 : vector<128x128xf32> to vector<8x16x128xf32>
    %c0_133 = arith.constant 0 : index
    %c0_134 = arith.constant 0 : index
    %c0_135 = arith.constant 0 : index
    %540 = vector.load %arg8[%c0_133, %c0_134, %c0_135] : memref<8x16x128xf32, #tpu.memory_space<vmem>>, vector<8x16x128xf32>
    tpu.vector_store %arg8[%c0_133, %c0_134, %c0_135], %539 {strides = array<i32>} : memref<8x16x128xf32, #tpu.memory_space<vmem>>, vector<8x16x128xf32>,
    return
  }
  func.func @transform_0(%arg0: i32) -> (i32, i32, i32) {
    %c0_i32 = arith.constant 0 : i32
    %c0_i32_0 = arith.constant 0 : i32
    %c0_i32_1 = arith.constant 0 : i32
    return %arg0, %c0_i32, %c0_i32_0 : i32, i32, i32
  }
  func.func @transform_1(%arg0: i32) -> (i32, i32) {
    %c0_i32 = arith.constant 0 : i32
    %c0_i32_0 = arith.constant 0 : i32
    %c0_i32_1 = arith.constant 0 : i32
    return %c0_i32, %c0_i32_0 : i32, i32
  }
  func.func @transform_2(%arg0: i32) -> (i32, i32) {
    %c0_i32 = arith.constant 0 : i32
    %c0_i32_0 = arith.constant 0 : i32
    %c0_i32_1 = arith.constant 0 : i32
    return %c0_i32, %c0_i32_0 : i32, i32
  }
  func.func @transform_3(%arg0: i32) -> (i32, i32) {
    %c0_i32 = arith.constant 0 : i32
    %c0_i32_0 = arith.constant 0 : i32
    %c0_i32_1 = arith.constant 0 : i32
    return %c0_i32, %c0_i32_0 : i32, i32
  }
  func.func @transform_4(%arg0: i32) -> (i32, i32) {
    %c0_i32 = arith.constant 0 : i32
    %c0_i32_0 = arith.constant 0 : i32
    %c0_i32_1 = arith.constant 0 : i32
    return %c0_i32, %c0_i32_0 : i32, i32
  }
  func.func @transform_5(%arg0: i32) -> (i32, i32) {
    %c0_i32 = arith.constant 0 : i32
    %c0_i32_0 = arith.constant 0 : i32
    %c0_i32_1 = arith.constant 0 : i32
    return %c0_i32, %c0_i32_0 : i32, i32
  }
  func.func @transform_6(%arg0: i32) -> (i32, i32) {
    %c0_i32 = arith.constant 0 : i32
    %c0_i32_0 = arith.constant 0 : i32
    %c0_i32_1 = arith.constant 0 : i32
    return %c0_i32, %c0_i32_0 : i32, i32
  }
  func.func @transform_7(%arg0: i32) -> (i32, i32, i32) {
    %c0_i32 = arith.constant 0 : i32
    %c0_i32_0 = arith.constant 0 : i32
    %c0_i32_1 = arith.constant 0 : i32
    return %c0_i32, %arg0, %c0_i32_0 : i32, i32, i32
  }
}

</mosaic_0001>

<llo_original>
// kernel: gru_pos_tagger_forward.1
$region0: #{gru_pos_tagger_forward.1}
  #allocation0 [shape = 'u32[]', space=smem, size = 0x4, offset = 0x4, fixed_abs, tag = 'smem constant byte address 0x4 - core index']
  #allocation1 [shape = 'u32[72,128]{1,0:T(1,128)}', space=vmem, size = 0x9000, scoped, tag = 'internal scratch']
  #allocation2 [shape = 'f32[128,256]{1,0:T(8,128)}', space=vmem, size = 0x20000, scoped, tag = 'scratch operand']
  #allocation3 [shape = 'f32[128,64]{1,0:T(8,128)}', space=vmem, size = 0x10000, scoped, tag = 'scratch operand']
  %s0 = inlined_call_operand.vmem [shape: bf16[1,128,32], index: 0, kind: input, shape index: {}]
  %s1 = inlined_call_operand.vmem [shape: bf16[32,256], index: 1, kind: input, shape index: {}]
  %s2 = inlined_call_operand.vmem [shape: f32[1,256], index: 2, kind: input, shape index: {}]
  %s3 = inlined_call_operand.vmem [shape: bf16[64,256], index: 3, kind: input, shape index: {}]
  %s4 = inlined_call_operand.vmem [shape: f32[1,64], index: 4, kind: input, shape index: {}]
  %s5 = inlined_call_operand.vmem [shape: bf16[64,128], index: 5, kind: input, shape index: {}]
  %s6 = inlined_call_operand.vmem [shape: f32[1,128], index: 6, kind: input, shape index: {}]
  %s7 = inlined_call_operand.hbm [shape: f32[8,16,128], index: 7, kind: output, shape index: {}]
  %s8 = sld [smem:[#allocation0]]
  $region38: #{gru_pos_tagger_forward.1} parent=0
    _
  %s10 = ssub.s32 1, %s8
  %s11 = scalar_select 0, %s10, %s8
  $region1: #{gru_pos_tagger_forward.1} parent=0
    #allocation4 [shape = 'u8[65536]{0}', space=vmem, size = 0x10000, scoped, tag = 'output window, operand 0, single buffered']
    #allocation5 [shape = 's32[1]{0}', space=sflag, size = 0x4, scoped, tag = 'scoped memory for gru_pos_tagger_forward.1']
    %12 = vsyncpa [#allocation5], 0
    // Predicated region
    $region2: #{gru_pos_tagger_forward.1} parent=1 // pred_check
      _
    $region3: #{gru_pos_tagger_forward.1} parent=1 // pred_check_branch
      %14 = sbr.rel (0) target = $region5
    $region4: #{gru_pos_tagger_forward.1} parent=1 // pred_region
      _
    $region5: #{gru_pos_tagger_forward.1} parent=1 // pred_fallthru
      _
    // Predicated region
    $region6: #{gru_pos_tagger_forward.1} parent=1 // pred_check
      _
    $region7: #{gru_pos_tagger_forward.1} parent=1 // pred_check_branch
      %16 = sbr.rel (0) target = $region9
    $region8: #{gru_pos_tagger_forward.1} parent=1 // pred_region
      _
    $region9: #{gru_pos_tagger_forward.1} parent=1 // pred_fallthru
      _
    // Predicated region
    $region10: #{gru_pos_tagger_forward.1} parent=1 // pred_check
      _
    $region11: #{gru_pos_tagger_forward.1} parent=1 // pred_check_branch
      %18 = sbr.rel (0) target = $region13
    $region12: #{gru_pos_tagger_forward.1} parent=1 // pred_region
      _
    $region13: #{gru_pos_tagger_forward.1} parent=1 // pred_fallthru
      _
    // Predicated region
    $region14: #{gru_pos_tagger_forward.1} parent=1 // pred_check
      _
    $region15: #{gru_pos_tagger_forward.1} parent=1 // pred_check_branch
      %20 = sbr.rel (0) target = $region17
    $region16: #{gru_pos_tagger_forward.1} parent=1 // pred_region
      _
    $region17: #{gru_pos_tagger_forward.1} parent=1 // pred_fallthru
      _
    // Predicated region
    $region18: #{gru_pos_tagger_forward.1} parent=1 // pred_check
      _
    $region19: #{gru_pos_tagger_forward.1} parent=1 // pred_check_branch
      %22 = sbr.rel (0) target = $region21
    $region20: #{gru_pos_tagger_forward.1} parent=1 // pred_region
      _
    $region21: #{gru_pos_tagger_forward.1} parent=1 // pred_fallthru
      _
    // Predicated region
    $region22: #{gru_pos_tagger_forward.1} parent=1 // pred_check
      _
    $region23: #{gru_pos_tagger_forward.1} parent=1 // pred_check_branch
      %24 = sbr.rel (0) target = $region25
    $region24: #{gru_pos_tagger_forward.1} parent=1 // pred_region
      _
    $region25: #{gru_pos_tagger_forward.1} parent=1 // pred_fallthru
      _
    // Predicated region
    $region26: #{gru_pos_tagger_forward.1} parent=1 // pred_check
      _
    $region27: #{gru_pos_tagger_forward.1} parent=1 // pred_check_branch
      %26 = sbr.rel (0) target = $region29
    $region28: #{gru_pos_tagger_forward.1} parent=1 // pred_region
      _
    $region29: #{gru_pos_tagger_forward.1} parent=1 // pred_fallthru
      _
    %v28 = vld [vmem:[%s0] sm:$0xf]
    %v29 = vld [vmem:[%s0 + $0x4] sm:$0xf]
    %v30 = vld [vmem:[%s0 + $0x8] sm:$0xf]
    %v31 = vld [vmem:[%s0 + $0xc] sm:$0xf]
    %v32 = vld [vmem:[%s0 + $0x10] sm:$0xf]
    %v33 = vld [vmem:[%s0 + $0x14] sm:$0xf]
    %v34 = vld [vmem:[%s0 + $0x18] sm:$0xf]
    %v35 = vld [vmem:[%s0 + $0x1c] sm:$0xf]
    %v36 = vld [vmem:[%s0 + $0x20] sm:$0xf]
    %v37 = vld [vmem:[%s0 + $0x24] sm:$0xf]
    %v38 = vld [vmem:[%s0 + $0x28] sm:$0xf]
    %v39 = vld [vmem:[%s0 + $0x2c] sm:$0xf]
    %v40 = vld [vmem:[%s0 + $0x30] sm:$0xf]
    %v41 = vld [vmem:[%s0 + $0x34] sm:$0xf]
    %v42 = vld [vmem:[%s0 + $0x38] sm:$0xf]
    %v43 = vld [vmem:[%s0 + $0x3c] sm:$0xf]
    %v44 = vld [vmem:[%s1] sm:$0xff]
    %v45 = vld [vmem:[%s1 + $0x8] sm:$0xff]
    %v46 = vld [vmem:[%s1 + $0x10] sm:$0xff]
    %v47 = vld [vmem:[%s1 + $0x18] sm:$0xff]
    %v48 = vld [vmem:[%s2] sm:$0x3]
    %v50 = vperm.slane %v48, 0
    %v51 = vperm.slane %v48, 1
    %v70 = vunpack.c.l.b16 %v28
    %v71 = vunpack.c.l.b16 %v29
    %v72 = vunpack.c.l.b16 %v30
    %v73 = vunpack.c.l.b16 %v31
    %v74 = vunpack.c.l.b16 %v32
    %v75 = vunpack.c.l.b16 %v33
    %v76 = vunpack.c.l.b16 %v34
    %v77 = vunpack.c.l.b16 %v35
    %v78 = vunpack.c.l.b16 %v36
    %v79 = vunpack.c.l.b16 %v37
    %v80 = vunpack.c.l.b16 %v38
    %v81 = vunpack.c.l.b16 %v39
    %v82 = vunpack.c.l.b16 %v40
    %v83 = vunpack.c.l.b16 %v41
    %v84 = vunpack.c.l.b16 %v42
    %v85 = vunpack.c.l.b16 %v43
    %v86 = vpack.c.b16 %v71, %v70
    %v87 = vpack.c.b16 %v73, %v72
    %v88 = vpack.c.b16 %v75, %v74
    %v89 = vpack.c.b16 %v77, %v76
    %v90 = vpack.c.b16 %v79, %v78
    %v91 = vpack.c.b16 %v81, %v80
    %v92 = vpack.c.b16 %v83, %v82
    %v93 = vpack.c.b16 %v85, %v84
    %v98 = vunpack.c.l.b16 %v44
    %v99 = vunpack.c.h.b16 %v44
    %v100 = vunpack.c.l.b16 %v45
    %v101 = vunpack.c.h.b16 %v45
    %v102 = vunpack.c.l.b16 %v46
    %v103 = vunpack.c.h.b16 %v46
    %v104 = vunpack.c.l.b16 %v47
    %v105 = vunpack.c.h.b16 %v47
    %v106 = vpack.c.b16 %v100, %v98
    %v107 = vpack.c.b16 %v101, %v99
    %v108 = vpack.c.b16 %v104, %v102
    %v109 = vpack.c.b16 %v105, %v103
    %vm114 = vcmask 261120
    %v116 = vsel %vm114, %v86, 0
    %v119 = vsel %vm114, %v87, 0
    %v122 = vsel %vm114, %v88, 0
    %v125 = vsel %vm114, %v89, 0
    %v128 = vsel %vm114, %v90, 0
    %v131 = vsel %vm114, %v91, 0
    %v134 = vsel %vm114, %v92, 0
    %v137 = vsel %vm114, %v93, 0
    %139 = vmatpush.bf16.msra.mxu0 0
    %140 = vmatpush.bf16.msra.mxu0 0
    %141 = vmatpush.bf16.msra.mxu0 0
    %142 = vmatpush.bf16.msra.mxu0 0
    %143 = vmatpush.bf16.msra.mxu0 0
    %144 = vmatpush.bf16.msra.mxu0 0
    %145 = vmatpush.bf16.msra.mxu0 %v108
    %146 = vmatpush.bf16.msra.mxu0 %v106
    %147 = vmatmul.bf16.gmra.mxu0 %v116
    %v148 = vpop.f32.mrf.mxu0
    %v149 = vadd.f32 %v50, %v148
    %v150 = vpop.f32.mrf.mxu0
    %v151 = vadd.f32 %v50, %v150
    %152 = vmatmul.bf16.gmra.mxu0 %v119
    %v153 = vpop.f32.mrf.mxu0
    %v154 = vadd.f32 %v50, %v153
    %v155 = vpop.f32.mrf.mxu0
    %v156 = vadd.f32 %v50, %v155
    %157 = vmatmul.bf16.gmra.mxu0 %v122
    %v158 = vpop.f32.mrf.mxu0
    %v159 = vadd.f32 %v50, %v158
    %v160 = vpop.f32.mrf.mxu0
    %v161 = vadd.f32 %v50, %v160
    %162 = vmatmul.bf16.gmra.mxu0 %v125
    %v163 = vpop.f32.mrf.mxu0
    %v164 = vadd.f32 %v50, %v163
    %v165 = vpop.f32.mrf.mxu0
    %v166 = vadd.f32 %v50, %v165
    %167 = vmatmul.bf16.gmra.mxu0 %v128
    %v168 = vpop.f32.mrf.mxu0
    %v169 = vadd.f32 %v50, %v168
    %v170 = vpop.f32.mrf.mxu0
    %v171 = vadd.f32 %v50, %v170
    %172 = vmatmul.bf16.gmra.mxu0 %v131
    %v173 = vpop.f32.mrf.mxu0
    %v174 = vadd.f32 %v50, %v173
    %v175 = vpop.f32.mrf.mxu0
    %v176 = vadd.f32 %v50, %v175
    %177 = vmatmul.bf16.gmra.mxu0 %v134
    %v178 = vpop.f32.mrf.mxu0
    %v179 = vadd.f32 %v50, %v178
    %v180 = vpop.f32.mrf.mxu0
    %v181 = vadd.f32 %v50, %v180
    %182 = vmatmul.bf16.gmra.mxu0 %v137
    %v183 = vpop.f32.mrf.mxu0
    %v184 = vadd.f32 %v50, %v183
    %v185 = vpop.f32.mrf.mxu0
    %v186 = vadd.f32 %v50, %v185
    %187 = vdwg.mxu0
    %188 = vmatpush.bf16.msra.mxu0 0
    %189 = vmatpush.bf16.msra.mxu0 0
    %190 = vmatpush.bf16.msra.mxu0 0
    %191 = vmatpush.bf16.msra.mxu0 0
    %192 = vmatpush.bf16.msra.mxu0 0
    %193 = vmatpush.bf16.msra.mxu0 0
    %194 = vmatpush.bf16.msra.mxu0 %v109
    %195 = vmatpush.bf16.msra.mxu0 %v107
    %196 = vmatmul.bf16.gmra.mxu0 %v116
    %v197 = vpop.f32.mrf.mxu0
    %v198 = vadd.f32 %v51, %v197
    %v199 = vpop.f32.mrf.mxu0
    %v200 = vadd.f32 %v51, %v199
    %201 = vmatmul.bf16.gmra.mxu0 %v119
    %v202 = vpop.f32.mrf.mxu0
    %v203 = vadd.f32 %v51, %v202
    %v204 = vpop.f32.mrf.mxu0
    %v205 = vadd.f32 %v51, %v204
    %206 = vmatmul.bf16.gmra.mxu0 %v122
    %v207 = vpop.f32.mrf.mxu0
    %v208 = vadd.f32 %v51, %v207
    %v209 = vpop.f32.mrf.mxu0
    %v210 = vadd.f32 %v51, %v209
    %211 = vmatmul.bf16.gmra.mxu0 %v125
    %v212 = vpop.f32.mrf.mxu0
    %v213 = vadd.f32 %v51, %v212
    %v214 = vpop.f32.mrf.mxu0
    %v215 = vadd.f32 %v51, %v214
    %216 = vmatmul.bf16.gmra.mxu0 %v128
    %v217 = vpop.f32.mrf.mxu0
    %v218 = vadd.f32 %v51, %v217
    %v219 = vpop.f32.mrf.mxu0
    %v220 = vadd.f32 %v51, %v219
    %221 = vmatmul.bf16.gmra.mxu0 %v131
    %v222 = vpop.f32.mrf.mxu0
    %v223 = vadd.f32 %v51, %v222
    %v224 = vpop.f32.mrf.mxu0
    %v225 = vadd.f32 %v51, %v224
    %226 = vmatmul.bf16.gmra.mxu0 %v134
    %v227 = vpop.f32.mrf.mxu0
    %v228 = vadd.f32 %v51, %v227
    %v229 = vpop.f32.mrf.mxu0
    %v230 = vadd.f32 %v51, %v229
    %231 = vmatmul.bf16.gmra.mxu0 %v137
    %v232 = vpop.f32.mrf.mxu0
    %v233 = vadd.f32 %v51, %v232
    %v234 = vpop.f32.mrf.mxu0
    %v235 = vadd.f32 %v51, %v234
    %236 = vdwg.mxu0
    %237 = vst [vmem:[#allocation2] sm:$0xff] %v149
    %238 = vst [vmem:[#allocation2 + $0x8] sm:$0xff] %v198
    %239 = vst [vmem:[#allocation2 + $0x10] sm:$0xff] %v151
    %240 = vst [vmem:[#allocation2 + $0x18] sm:$0xff] %v200
    %241 = vst [vmem:[#allocation2 + $0x20] sm:$0xff] %v154
    %242 = vst [vmem:[#allocation2 + $0x28] sm:$0xff] %v203
    %243 = vst [vmem:[#allocation2 + $0x30] sm:$0xff] %v156
    %244 = vst [vmem:[#allocation2 + $0x38] sm:$0xff] %v205
    %245 = vst [vmem:[#allocation2 + $0x40] sm:$0xff] %v159
    %246 = vst [vmem:[#allocation2 + $0x48] sm:$0xff] %v208
    %247 = vst [vmem:[#allocation2 + $0x50] sm:$0xff] %v161
    %248 = vst [vmem:[#allocation2 + $0x58] sm:$0xff] %v210
    %249 = vst [vmem:[#allocation2 + $0x60] sm:$0xff] %v164
    %250 = vst [vmem:[#allocation2 + $0x68] sm:$0xff] %v213
    %251 = vst [vmem:[#allocation2 + $0x70] sm:$0xff] %v166
    %252 = vst [vmem:[#allocation2 + $0x78] sm:$0xff] %v215
    %253 = vst [vmem:[#allocation2 + $0x80] sm:$0xff] %v169
    %254 = vst [vmem:[#allocation2 + $0x88] sm:$0xff] %v218
    %255 = vst [vmem:[#allocation2 + $0x90] sm:$0xff] %v171
    %256 = vst [vmem:[#allocation2 + $0x98] sm:$0xff] %v220
    %257 = vst [vmem:[#allocation2 + $0xa0] sm:$0xff] %v174
    %258 = vst [vmem:[#allocation2 + $0xa8] sm:$0xff] %v223
    %259 = vst [vmem:[#allocation2 + $0xb0] sm:$0xff] %v176
    %260 = vst [vmem:[#allocation2 + $0xb8] sm:$0xff] %v225
    %261 = vst [vmem:[#allocation2 + $0xc0] sm:$0xff] %v179
    %262 = vst [vmem:[#allocation2 + $0xc8] sm:$0xff] %v228
    %263 = vst [vmem:[#allocation2 + $0xd0] sm:$0xff] %v181
    %264 = vst [vmem:[#allocation2 + $0xd8] sm:$0xff] %v230
    %265 = vst [vmem:[#allocation2 + $0xe0] sm:$0xff] %v184
    %266 = vst [vmem:[#allocation2 + $0xe8] sm:$0xff] %v233
    %267 = vst [vmem:[#allocation2 + $0xf0] sm:$0xff] %v186
    %268 = vst [vmem:[#allocation2 + $0xf8] sm:$0xff] %v235
    %v269 = vld [vmem:[%s3] sm:$0xff]
    %v270 = vld [vmem:[%s3 + $0x8] sm:$0xff]
    %v271 = vld [vmem:[%s3 + $0x10] sm:$0xff]
    %v272 = vld [vmem:[%s3 + $0x18] sm:$0xff]
    %v273 = vld [vmem:[%s3 + $0x20] sm:$0xff]
    %v274 = vld [vmem:[%s3 + $0x28] sm:$0xff]
    %v275 = vld [vmem:[%s3 + $0x30] sm:$0xff]
    %v276 = vld [vmem:[%s3 + $0x38] sm:$0xff]
    %v277 = vld [vmem:[%s4] sm:$0x1]
    %v286 = vunpack.c.l.b16 %v269
    %v287 = vunpack.c.h.b16 %v269
    %v288 = vunpack.c.l.b16 %v270
    %v289 = vunpack.c.h.b16 %v270
    %v290 = vunpack.c.l.b16 %v271
    %v291 = vunpack.c.h.b16 %v271
    %v292 = vunpack.c.l.b16 %v272
    %v293 = vunpack.c.h.b16 %v272
    %v294 = vunpack.c.l.b16 %v273
    %v295 = vunpack.c.h.b16 %v273
    %v296 = vunpack.c.l.b16 %v274
    %v297 = vunpack.c.h.b16 %v274
    %v298 = vunpack.c.l.b16 %v275
    %v299 = vunpack.c.h.b16 %v275
    %v300 = vunpack.c.l.b16 %v276
    %v301 = vunpack.c.h.b16 %v276
    %v302 = vpack.c.b16 %v288, %v286
    %v303 = vpack.c.b16 %v289, %v287
    %v304 = vpack.c.b16 %v292, %v290
    %v305 = vpack.c.b16 %v293, %v291
    %v306 = vpack.c.b16 %v296, %v294
    %v307 = vpack.c.b16 %v297, %v295
    %v308 = vpack.c.b16 %v300, %v298
    %v309 = vpack.c.b16 %v301, %v299
    %vm318 = vcmask 523264
    %v320 = vsel %vm318, 0, 0
    %322 = vmatpush.bf16.msra.mxu0 0
    %323 = vmatpush.bf16.msra.mxu0 0
    %324 = vmatpush.bf16.msra.mxu0 0
    %325 = vmatpush.bf16.msra.mxu0 0
    %326 = vmatpush.bf16.msra.mxu0 %v308
    %327 = vmatpush.bf16.msra.mxu0 %v306
    %328 = vmatpush.bf16.msra.mxu0 %v304
    %329 = vmatpush.bf16.msra.mxu0 %v302
    %330 = vmatmul.bf16.gmra.mxu0 %v320
    %v331 = vpop.f32.mrf.mxu0
    %v332 = vadd.f32 0.0, %v331
    %v333 = vpop.f32.mrf.mxu0
    %v334 = vadd.f32 0.0, %v333
    %335 = vdwg.mxu0
    %336 = vmatpush.bf16.msra.mxu0 0
    %337 = vmatpush.bf16.msra.mxu0 0
    %338 = vmatpush.bf16.msra.mxu0 0
    %339 = vmatpush.bf16.msra.mxu0 0
    %340 = vmatpush.bf16.msra.mxu0 %v309
    %341 = vmatpush.bf16.msra.mxu0 %v307
    %342 = vmatpush.bf16.msra.mxu0 %v305
    %343 = vmatpush.bf16.msra.mxu0 %v303
    %344 = vmatmul.bf16.gmra.mxu0 %v320
    %v345 = vpop.f32.mrf.mxu0
    %v346 = vadd.f32 0.0, %v345
    %v347 = vpop.f32.mrf.mxu0
    %v348 = vadd.f32 0.0, %v347
    %349 = vdwg.mxu0
    %v350 = vld [vmem:[#allocation2] sm:$0xff]
    %v351 = vld [vmem:[#allocation2 + $0x10] sm:$0xff]
    %v352 = vld [vmem:[#allocation2 + $0xe8] sm:$0xff]
    %v353 = vld [vmem:[#allocation2 + $0xf8] sm:$0xff]
    %v354 = vadd.f32 %v350, %v332
    %v355 = vadd.f32 %v351, %v334
    %v356 = vxor.u32 %v354, 2147483648
    %v357 = vxor.u32 %v355, 2147483648
    %v358 = vmul.f32 %v356, 1.442695
    %v359 = vpow.pop %v358
    %v360 = vmul.f32 %v357, 1.442695
    %v361 = vpow.pop %v360
    %v362 = vadd.f32 %v359, 1.0
    %v363 = vadd.f32 %v361, 1.0
    %v364 = vrcp.pop %v362
    %v365 = vmul.f32 %v362, %v364
    %v366 = vsub.f32 1.0, %v365
    %v367 = vmul.f32 %v364, %v366
    %v368 = vadd.f32 %v364, %v367
    %vm369 = vweird.f32 %v362
    %vm370 = vweird.f32 %v364
    %vm371 = vmor %vm369, %vm370
    %v372 = vsel %vm371, %v364, %v368
    %v373 = vand.u32 2147483647, %v362
    %vm374 = vcmp.eq.f32.partialorder %v373, 8.507059e+37
    %v375 = vand.u32 %v362, 2147483648
    %v376 = vor.u32 1.1754944e-38, %v375
    %v377 = vsel %vm374, %v376, %v372
    %v378 = vmul.f32 1.0, %v377
    %v379 = vrcp.pop %v363
    %v380 = vmul.f32 %v363, %v379
    %v381 = vsub.f32 1.0, %v380
    %v382 = vmul.f32 %v379, %v381
    %v383 = vadd.f32 %v379, %v382
    %vm384 = vweird.f32 %v363
    %vm385 = vweird.f32 %v379
    %vm386 = vmor %vm384, %vm385
    %v387 = vsel %vm386, %v379, %v383
    %v388 = vand.u32 2147483647, %v363
    %vm389 = vcmp.eq.f32.partialorder %v388, 8.507059e+37
    %v390 = vand.u32 %v363, 2147483648
    %v391 = vor.u32 1.1754944e-38, %v390
    %v392 = vsel %vm389, %v391, %v387
    %v393 = vmul.f32 1.0, %v392
    %v395 = vperm.slane %v277, 0
    %396 = vrot.lane.b32.xlu0 %v395, 64
    %v397 = vpop.permute.xlu0 %396
    %v399 = vadd.f32 %v332, %v397
    %v400 = vadd.f32 %v334, %v397
    %403 = vrot.lane.b32.xlu0 %v399, 64
    %v404 = vpop.permute.xlu0 %403
    %405 = vrot.lane.b32.xlu0 %v400, 64
    %v406 = vpop.permute.xlu0 %405
    %v409 = vmul.f32 %v378, %v404
    %v410 = vmul.f32 %v393, %v406
    %413 = vrot.lane.b32.xlu0 %v409, 64
    %v414 = vpop.permute.xlu0 %413
    %415 = vrot.lane.b32.xlu0 %v410, 64
    %v416 = vpop.permute.xlu0 %415
    %v419 = vadd.f32 %v350, %v414
    %v420 = vadd.f32 %v351, %v416
    %v421 = vtanh.pop %v419
    %v422 = vtanh.pop %v420
    %v423 = vsub.f32 1.0, %v378
    %v424 = vsub.f32 1.0, %v393
    %427 = vrot.lane.b32.xlu0 %v421, 96
    %v428 = vpop.permute.xlu0 %427
    %429 = vrot.lane.b32.xlu0 %v422, 96
    %v430 = vpop.permute.xlu0 %429
    %v433 = vmul.f32 %v423, %v428
    %v434 = vmul.f32 %v424, %v430
    %v435 = vmul.f32 %v378, 0.0
    %v436 = vmul.f32 %v393, 0.0
    %v437 = vadd.f32 %v433, %v435
    %v438 = vadd.f32 %v434, %v436
    %v439 = vadd.f32 %v352, %v346
    %v440 = vadd.f32 %v353, %v348
    %v441 = vxor.u32 %v439, 2147483648
    %v442 = vxor.u32 %v440, 2147483648
    %v443 = vmul.f32 %v441, 1.442695
    %v444 = vpow.pop %v443
    %v445 = vmul.f32 %v442, 1.442695
    %v446 = vpow.pop %v445
    %v447 = vadd.f32 %v444, 1.0
    %v448 = vadd.f32 %v446, 1.0
    %v449 = vrcp.pop %v447
    %v450 = vmul.f32 %v447, %v449
    %v451 = vsub.f32 1.0, %v450
    %v452 = vmul.f32 %v449, %v451
    %v453 = vadd.f32 %v449, %v452
    %vm454 = vweird.f32 %v447
    %vm455 = vweird.f32 %v449
    %vm456 = vmor %vm454, %vm455
    %v457 = vsel %vm456, %v449, %v453
    %v458 = vand.u32 2147483647, %v447
    %vm459 = vcmp.eq.f32.partialorder %v458, 8.507059e+37
    %v460 = vand.u32 %v447, 2147483648
    %v461 = vor.u32 1.1754944e-38, %v460
    %v462 = vsel %vm459, %v461, %v457
    %v463 = vmul.f32 1.0, %v462
    %v464 = vrcp.pop %v448
    %v465 = vmul.f32 %v448, %v464
    %v466 = vsub.f32 1.0, %v465
    %v467 = vmul.f32 %v464, %v466
    %v468 = vadd.f32 %v464, %v467
    %vm469 = vweird.f32 %v448
    %vm470 = vweird.f32 %v464
    %vm471 = vmor %vm469, %vm470
    %v472 = vsel %vm471, %v464, %v468
    %v473 = vand.u32 2147483647, %v448
    %vm474 = vcmp.eq.f32.partialorder %v473, 8.507059e+37
    %v475 = vand.u32 %v448, 2147483648
    %v476 = vor.u32 1.1754944e-38, %v475
    %v477 = vsel %vm474, %v476, %v472
    %v478 = vmul.f32 1.0, %v477
    %479 = vrot.lane.b32.xlu0 %v395, 32
    %v480 = vpop.permute.xlu0 %479
    %v482 = vadd.f32 %v346, %v480
    %v483 = vadd.f32 %v348, %v480
    %486 = vrot.lane.b32.xlu0 %v482, 64
    %v487 = vpop.permute.xlu0 %486
    %488 = vrot.lane.b32.xlu0 %v483, 64
    %v489 = vpop.permute.xlu0 %488
    %v492 = vmul.f32 %v463, %v487
    %v493 = vmul.f32 %v478, %v489
    %496 = vrot.lane.b32.xlu0 %v492, 64
    %v497 = vpop.permute.xlu0 %496
    %498 = vrot.lane.b32.xlu0 %v493, 64
    %v499 = vpop.permute.xlu0 %498
    %v502 = vadd.f32 %v352, %v497
    %v503 = vadd.f32 %v353, %v499
    %v504 = vtanh.pop %v502
    %v505 = vtanh.pop %v503
    %v506 = vsub.f32 1.0, %v463
    %v507 = vsub.f32 1.0, %v478
    %510 = vrot.lane.b32.xlu0 %v504, 96
    %v511 = vpop.permute.xlu0 %510
    %512 = vrot.lane.b32.xlu0 %v505, 96
    %v513 = vpop.permute.xlu0 %512
    %v516 = vmul.f32 %v506, %v511
    %v517 = vmul.f32 %v507, %v513
    %v518 = vmul.f32 %v463, 0.0
    %v519 = vmul.f32 %v478, 0.0
    %v520 = vadd.f32 %v516, %v518
    %v521 = vadd.f32 %v517, %v519
    %524 = vrot.lane.b32.xlu0 %v437, 96
    %v525 = vpop.permute.xlu0 %524
    %526 = vrot.lane.b32.xlu0 %v438, 96
    %v527 = vpop.permute.xlu0 %526
    %530 = vst.msk [vmem:[#allocation3] sm:$0xff] %vm114, %v525
    %531 = vst.msk [vmem:[#allocation3 + $0x8] sm:$0xff] %vm114, %v527
    %vm532 = vcmask 523520
    %533 = vst.msk [vmem:[#allocation3 + $0x70] sm:$0xff] %vm532, %v520
    %534 = vst.msk [vmem:[#allocation3 + $0x78] sm:$0xff] %vm532, %v521
    %v535 = vsel %vm114, %v525, %v520
    %v536 = vsel %vm114, %v527, %v521
    %v537 = vpack.c.bf16 %v536, %v535
    %v539 = vsel %vm318, %v537, 0
    %541 = vmatpush.bf16.msra.mxu0 0
    %542 = vmatpush.bf16.msra.mxu0 0
    %543 = vmatpush.bf16.msra.mxu0 0
    %544 = vmatpush.bf16.msra.mxu0 0
    %545 = vmatpush.bf16.msra.mxu0 %v308
    %546 = vmatpush.bf16.msra.mxu0 %v306
    %547 = vmatpush.bf16.msra.mxu0 %v304
    %548 = vmatpush.bf16.msra.mxu0 %v302
    %549 = vmatmul.bf16.gmra.mxu0 %v539
    %v550 = vpop.f32.mrf.mxu0
    %v551 = vadd.f32 0.0, %v550
    %v552 = vpop.f32.mrf.mxu0
    %v553 = vadd.f32 0.0, %v552
    %554 = vdwg.mxu0
    %555 = vmatpush.bf16.msra.mxu0 0
    %556 = vmatpush.bf16.msra.mxu0 0
    %557 = vmatpush.bf16.msra.mxu0 0
    %558 = vmatpush.bf16.msra.mxu0 0
    %559 = vmatpush.bf16.msra.mxu0 %v309
    %560 = vmatpush.bf16.msra.mxu0 %v307
    %561 = vmatpush.bf16.msra.mxu0 %v305
    %562 = vmatpush.bf16.msra.mxu0 %v303
    %563 = vmatmul.bf16.gmra.mxu0 %v539
    %v564 = vpop.f32.mrf.mxu0
    %v565 = vadd.f32 0.0, %v564
    %v566 = vpop.f32.mrf.mxu0
    %v567 = vadd.f32 0.0, %v566
    %568 = vdwg.mxu0
    %v569 = vld [vmem:[#allocation2 + $0x20] sm:$0xff]
    %v570 = vld [vmem:[#allocation2 + $0x30] sm:$0xff]
    %v571 = vld [vmem:[#allocation2 + $0xc8] sm:$0xff]
    %v572 = vld [vmem:[#allocation2 + $0xd8] sm:$0xff]
    %v573 = vadd.f32 %v569, %v551
    %v574 = vadd.f32 %v570, %v553
    %v575 = vxor.u32 %v573, 2147483648
    %v576 = vxor.u32 %v574, 2147483648
    %v577 = vmul.f32 %v575, 1.442695
    %v578 = vpow.pop %v577
    %v579 = vmul.f32 %v576, 1.442695
    %v580 = vpow.pop %v579
    %v581 = vadd.f32 %v578, 1.0
    %v582 = vadd.f32 %v580, 1.0
    %v583 = vrcp.pop %v581
    %v584 = vmul.f32 %v581, %v583
    %v585 = vsub.f32 1.0, %v584
    %v586 = vmul.f32 %v583, %v585
    %v587 = vadd.f32 %v583, %v586
    %vm588 = vweird.f32 %v581
    %vm589 = vweird.f32 %v583
    %vm590 = vmor %vm588, %vm589
    %v591 = vsel %vm590, %v583, %v587
    %v592 = vand.u32 2147483647, %v581
    %vm593 = vcmp.eq.f32.partialorder %v592, 8.507059e+37
    %v594 = vand.u32 %v581, 2147483648
    %v595 = vor.u32 1.1754944e-38, %v594
    %v596 = vsel %vm593, %v595, %v591
    %v597 = vmul.f32 1.0, %v596
    %v598 = vrcp.pop %v582
    %v599 = vmul.f32 %v582, %v598
    %v600 = vsub.f32 1.0, %v599
    %v601 = vmul.f32 %v598, %v600
    %v602 = vadd.f32 %v598, %v601
    %vm603 = vweird.f32 %v582
    %vm604 = vweird.f32 %v598
    %vm605 = vmor %vm603, %vm604
    %v606 = vsel %vm605, %v598, %v602
    %v607 = vand.u32 2147483647, %v582
    %vm608 = vcmp.eq.f32.partialorder %v607, 8.507059e+37
    %v609 = vand.u32 %v582, 2147483648
    %v610 = vor.u32 1.1754944e-38, %v609
    %v611 = vsel %vm608, %v610, %v606
    %v612 = vmul.f32 1.0, %v611
    %v613 = vadd.f32 %v551, %v397
    %v614 = vadd.f32 %v553, %v397
    %617 = vrot.lane.b32.xlu0 %v613, 64
    %v618 = vpop.permute.xlu0 %617
    %619 = vrot.lane.b32.xlu0 %v614, 64
    %v620 = vpop.permute.xlu0 %619
    %v623 = vmul.f32 %v597, %v618
    %v624 = vmul.f32 %v612, %v620
    %627 = vrot.lane.b32.xlu0 %v623, 64
    %v628 = vpop.permute.xlu0 %627
    %629 = vrot.lane.b32.xlu0 %v624, 64
    %v630 = vpop.permute.xlu0 %629
    %v633 = vadd.f32 %v569, %v628
    %v634 = vadd.f32 %v570, %v630
    %v635 = vtanh.pop %v633
    %v636 = vtanh.pop %v634
    %v637 = vsub.f32 1.0, %v597
    %v638 = vsub.f32 1.0, %v612
    %641 = vrot.lane.b32.xlu0 %v635, 96
    %v642 = vpop.permute.xlu0 %641
    %643 = vrot.lane.b32.xlu0 %v636, 96
    %v644 = vpop.permute.xlu0 %643
    %v647 = vmul.f32 %v637, %v642
    %v648 = vmul.f32 %v638, %v644
    %651 = vrot.lane.b32.xlu0 %v535, 32
    %v652 = vpop.permute.xlu0 %651
    %653 = vrot.lane.b32.xlu0 %v536, 32
    %v654 = vpop.permute.xlu0 %653
    %v657 = vmul.f32 %v597, %v652
    %v658 = vmul.f32 %v612, %v654
    %v659 = vadd.f32 %v647, %v657
    %v660 = vadd.f32 %v648, %v658
    %v661 = vadd.f32 %v571, %v565
    %v662 = vadd.f32 %v572, %v567
    %v663 = vxor.u32 %v661, 2147483648
    %v664 = vxor.u32 %v662, 2147483648
    %v665 = vmul.f32 %v663, 1.442695
    %v666 = vpow.pop %v665
    %v667 = vmul.f32 %v664, 1.442695
    %v668 = vpow.pop %v667
    %v669 = vadd.f32 %v666, 1.0
    %v670 = vadd.f32 %v668, 1.0
    %v671 = vrcp.pop %v669
    %v672 = vmul.f32 %v669, %v671
    %v673 = vsub.f32 1.0, %v672
    %v674 = vmul.f32 %v671, %v673
    %v675 = vadd.f32 %v671, %v674
    %vm676 = vweird.f32 %v669
    %vm677 = vweird.f32 %v671
    %vm678 = vmor %vm676, %vm677
    %v679 = vsel %vm678, %v671, %v675
    %v680 = vand.u32 2147483647, %v669
    %vm681 = vcmp.eq.f32.partialorder %v680, 8.507059e+37
    %v682 = vand.u32 %v669, 2147483648
    %v683 = vor.u32 1.1754944e-38, %v682
    %v684 = vsel %vm681, %v683, %v679
    %v685 = vmul.f32 1.0, %v684
    %v686 = vrcp.pop %v670
    %v687 = vmul.f32 %v670, %v686
    %v688 = vsub.f32 1.0, %v687
    %v689 = vmul.f32 %v686, %v688
    %v690 = vadd.f32 %v686, %v689
    %vm691 = vweird.f32 %v670
    %vm692 = vweird.f32 %v686
    %vm693 = vmor %vm691, %vm692
    %v694 = vsel %vm693, %v686, %v690
    %v695 = vand.u32 2147483647, %v670
    %vm696 = vcmp.eq.f32.partialorder %v695, 8.507059e+37
    %v697 = vand.u32 %v670, 2147483648
    %v698 = vor.u32 1.1754944e-38, %v697
    %v699 = vsel %vm696, %v698, %v694
    %v700 = vmul.f32 1.0, %v699
    %v701 = vadd.f32 %v565, %v480
    %v702 = vadd.f32 %v567, %v480
    %705 = vrot.lane.b32.xlu0 %v701, 64
    %v706 = vpop.permute.xlu0 %705
    %707 = vrot.lane.b32.xlu0 %v702, 64
    %v708 = vpop.permute.xlu0 %707
    %v711 = vmul.f32 %v685, %v706
    %v712 = vmul.f32 %v700, %v708
    %715 = vrot.lane.b32.xlu0 %v711, 64
    %v716 = vpop.permute.xlu0 %715
    %717 = vrot.lane.b32.xlu0 %v712, 64
    %v718 = vpop.permute.xlu0 %717
    %v721 = vadd.f32 %v571, %v716
    %v722 = vadd.f32 %v572, %v718
    %v723 = vtanh.pop %v721
    %v724 = vtanh.pop %v722
    %v725 = vsub.f32 1.0, %v685
    %v726 = vsub.f32 1.0, %v700
    %729 = vrot.lane.b32.xlu0 %v723, 96
    %v730 = vpop.permute.xlu0 %729
    %731 = vrot.lane.b32.xlu0 %v724, 96
    %v732 = vpop.permute.xlu0 %731
    %v735 = vmul.f32 %v725, %v730
    %v736 = vmul.f32 %v726, %v732
    %v737 = vmul.f32 %v685, %v535
    %v738 = vmul.f32 %v700, %v536
    %v739 = vadd.f32 %v735, %v737
    %v740 = vadd.f32 %v736, %v738
    %743 = vrot.lane.b32.xlu0 %v659, 96
    %v744 = vpop.permute.xlu0 %743
    %745 = vrot.lane.b32.xlu0 %v660, 96
    %v746 = vpop.permute.xlu0 %745
    %749 = vst.msk [vmem:[#allocation3 + $0x10] sm:$0xff] %vm114, %v744
    %750 = vst.msk [vmem:[#allocation3 + $0x18] sm:$0xff] %vm114, %v746
    %751 = vst.msk [vmem:[#allocation3 + $0x60] sm:$0xff] %vm532, %v739
    %752 = vst.msk [vmem:[#allocation3 + $0x68] sm:$0xff] %vm532, %v740
    %v753 = vsel %vm114, %v744, %v739
    %v754 = vsel %vm114, %v746, %v740
    %v755 = vpack.c.bf16 %v754, %v753
    %v757 = vsel %vm318, %v755, 0
    %759 = vmatpush.bf16.msra.mxu0 0
    %760 = vmatpush.bf16.msra.mxu0 0
    %761 = vmatpush.bf16.msra.mxu0 0
    %762 = vmatpush.bf16.msra.mxu0 0
    %763 = vmatpush.bf16.msra.mxu0 %v308
    %764 = vmatpush.bf16.msra.mxu0 %v306
    %765 = vmatpush.bf16.msra.mxu0 %v304
    %766 = vmatpush.bf16.msra.mxu0 %v302
    %767 = vmatmul.bf16.gmra.mxu0 %v757
    %v768 = vpop.f32.mrf.mxu0
    %v769 = vadd.f32 0.0, %v768
    %v770 = vpop.f32.mrf.mxu0
    %v771 = vadd.f32 0.0, %v770
    %772 = vdwg.mxu0
    %773 = vmatpush.bf16.msra.mxu0 0
    %774 = vmatpush.bf16.msra.mxu0 0
    %775 = vmatpush.bf16.msra.mxu0 0
    %776 = vmatpush.bf16.msra.mxu0 0
    %777 = vmatpush.bf16.msra.mxu0 %v309
    %778 = vmatpush.bf16.msra.mxu0 %v307
    %779 = vmatpush.bf16.msra.mxu0 %v305
    %780 = vmatpush.bf16.msra.mxu0 %v303
    %781 = vmatmul.bf16.gmra.mxu0 %v757
    %v782 = vpop.f32.mrf.mxu0
    %v783 = vadd.f32 0.0, %v782
    %v784 = vpop.f32.mrf.mxu0
    %v785 = vadd.f32 0.0, %v784
    %786 = vdwg.mxu0
    %v787 = vld [vmem:[#allocation2 + $0x40] sm:$0xff]
    %v788 = vld [vmem:[#allocation2 + $0x50] sm:$0xff]
    %v789 = vld [vmem:[#allocation2 + $0xa8] sm:$0xff]
    %v790 = vld [vmem:[#allocation2 + $0xb8] sm:$0xff]
    %v791 = vadd.f32 %v787, %v769
    %v792 = vadd.f32 %v788, %v771
    %v793 = vxor.u32 %v791, 2147483648
    %v794 = vxor.u32 %v792, 2147483648
    %v795 = vmul.f32 %v793, 1.442695
    %v796 = vpow.pop %v795
    %v797 = vmul.f32 %v794, 1.442695
    %v798 = vpow.pop %v797
    %v799 = vadd.f32 %v796, 1.0
    %v800 = vadd.f32 %v798, 1.0
    %v801 = vrcp.pop %v799
    %v802 = vmul.f32 %v799, %v801
    %v803 = vsub.f32 1.0, %v802
    %v804 = vmul.f32 %v801, %v803
    %v805 = vadd.f32 %v801, %v804
    %vm806 = vweird.f32 %v799
    %vm807 = vweird.f32 %v801
    %vm808 = vmor %vm806, %vm807
    %v809 = vsel %vm808, %v801, %v805
    %v810 = vand.u32 2147483647, %v799
    %vm811 = vcmp.eq.f32.partialorder %v810, 8.507059e+37
    %v812 = vand.u32 %v799, 2147483648
    %v813 = vor.u32 1.1754944e-38, %v812
    %v814 = vsel %vm811, %v813, %v809
    %v815 = vmul.f32 1.0, %v814
    %v816 = vrcp.pop %v800
    %v817 = vmul.f32 %v800, %v816
    %v818 = vsub.f32 1.0, %v817
    %v819 = vmul.f32 %v816, %v818
    %v820 = vadd.f32 %v816, %v819
    %vm821 = vweird.f32 %v800
    %vm822 = vweird.f32 %v816
    %vm823 = vmor %vm821, %vm822
    %v824 = vsel %vm823, %v816, %v820
    %v825 = vand.u32 2147483647, %v800
    %vm826 = vcmp.eq.f32.partialorder %v825, 8.507059e+37
    %v827 = vand.u32 %v800, 2147483648
    %v828 = vor.u32 1.1754944e-38, %v827
    %v829 = vsel %vm826, %v828, %v824
    %v830 = vmul.f32 1.0, %v829
    %v831 = vadd.f32 %v769, %v397
    %v832 = vadd.f32 %v771, %v397
    %835 = vrot.lane.b32.xlu0 %v831, 64
    %v836 = vpop.permute.xlu0 %835
    %837 = vrot.lane.b32.xlu0 %v832, 64
    %v838 = vpop.permute.xlu0 %837
    %v841 = vmul.f32 %v815, %v836
    %v842 = vmul.f32 %v830, %v838
    %845 = vrot.lane.b32.xlu0 %v841, 64
    %v846 = vpop.permute.xlu0 %845
    %847 = vrot.lane.b32.xlu0 %v842, 64
    %v848 = vpop.permute.xlu0 %847
    %v851 = vadd.f32 %v787, %v846
    %v852 = vadd.f32 %v788, %v848
    %v853 = vtanh.pop %v851
    %v854 = vtanh.pop %v852
    %v855 = vsub.f32 1.0, %v815
    %v856 = vsub.f32 1.0, %v830
    %859 = vrot.lane.b32.xlu0 %v853, 96
    %v860 = vpop.permute.xlu0 %859
    %861 = vrot.lane.b32.xlu0 %v854, 96
    %v862 = vpop.permute.xlu0 %861
    %v865 = vmul.f32 %v855, %v860
    %v866 = vmul.f32 %v856, %v862
    %869 = vrot.lane.b32.xlu0 %v753, 32
    %v870 = vpop.permute.xlu0 %869
    %871 = vrot.lane.b32.xlu0 %v754, 32
    %v872 = vpop.permute.xlu0 %871
    %v875 = vmul.f32 %v815, %v870
    %v876 = vmul.f32 %v830, %v872
    %v877 = vadd.f32 %v865, %v875
    %v878 = vadd.f32 %v866, %v876
    %v879 = vadd.f32 %v789, %v783
    %v880 = vadd.f32 %v790, %v785
    %v881 = vxor.u32 %v879, 2147483648
    %v882 = vxor.u32 %v880, 2147483648
    %v883 = vmul.f32 %v881, 1.442695
    %v884 = vpow.pop %v883
    %v885 = vmul.f32 %v882, 1.442695
    %v886 = vpow.pop %v885
    %v887 = vadd.f32 %v884, 1.0
    %v888 = vadd.f32 %v886, 1.0
    %v889 = vrcp.pop %v887
    %v890 = vmul.f32 %v887, %v889
    %v891 = vsub.f32 1.0, %v890
    %v892 = vmul.f32 %v889, %v891
    %v893 = vadd.f32 %v889, %v892
    %vm894 = vweird.f32 %v887
    %vm895 = vweird.f32 %v889
    %vm896 = vmor %vm894, %vm895
    %v897 = vsel %vm896, %v889, %v893
    %v898 = vand.u32 2147483647, %v887
    %vm899 = vcmp.eq.f32.partialorder %v898, 8.507059e+37
    %v900 = vand.u32 %v887, 2147483648
    %v901 = vor.u32 1.1754944e-38, %v900
    %v902 = vsel %vm899, %v901, %v897
    %v903 = vmul.f32 1.0, %v902
    %v904 = vrcp.pop %v888
    %v905 = vmul.f32 %v888, %v904
    %v906 = vsub.f32 1.0, %v905
    %v907 = vmul.f32 %v904, %v906
    %v908 = vadd.f32 %v904, %v907
    %vm909 = vweird.f32 %v888
    %vm910 = vweird.f32 %v904
    %vm911 = vmor %vm909, %vm910
    %v912 = vsel %vm911, %v904, %v908
    %v913 = vand.u32 2147483647, %v888
    %vm914 = vcmp.eq.f32.partialorder %v913, 8.507059e+37
    %v915 = vand.u32 %v888, 2147483648
    %v916 = vor.u32 1.1754944e-38, %v915
    %v917 = vsel %vm914, %v916, %v912
    %v918 = vmul.f32 1.0, %v917
    %v919 = vadd.f32 %v783, %v480
    %v920 = vadd.f32 %v785, %v480
    %923 = vrot.lane.b32.xlu0 %v919, 64
    %v924 = vpop.permute.xlu0 %923
    %925 = vrot.lane.b32.xlu0 %v920, 64
    %v926 = vpop.permute.xlu0 %925
    %v929 = vmul.f32 %v903, %v924
    %v930 = vmul.f32 %v918, %v926
    %933 = vrot.lane.b32.xlu0 %v929, 64
    %v934 = vpop.permute.xlu0 %933
    %935 = vrot.lane.b32.xlu0 %v930, 64
    %v936 = vpop.permute.xlu0 %935
    %v939 = vadd.f32 %v789, %v934
    %v940 = vadd.f32 %v790, %v936
    %v941 = vtanh.pop %v939
    %v942 = vtanh.pop %v940
    %v943 = vsub.f32 1.0, %v903
    %v944 = vsub.f32 1.0, %v918
    %947 = vrot.lane.b32.xlu0 %v941, 96
    %v948 = vpop.permute.xlu0 %947
    %949 = vrot.lane.b32.xlu0 %v942, 96
    %v950 = vpop.permute.xlu0 %949
    %v953 = vmul.f32 %v943, %v948
    %v954 = vmul.f32 %v944, %v950
    %v955 = vmul.f32 %v903, %v753
    %v956 = vmul.f32 %v918, %v754
    %v957 = vadd.f32 %v953, %v955
    %v958 = vadd.f32 %v954, %v956
    %961 = vrot.lane.b32.xlu0 %v877, 96
    %v962 = vpop.permute.xlu0 %961
    %963 = vrot.lane.b32.xlu0 %v878, 96
    %v964 = vpop.permute.xlu0 %963
    %967 = vst.msk [vmem:[#allocation3 + $0x20] sm:$0xff] %vm114, %v962
    %968 = vst.msk [vmem:[#allocation3 + $0x28] sm:$0xff] %vm114, %v964
    %969 = vst.msk [vmem:[#allocation3 + $0x50] sm:$0xff] %vm532, %v957
    %970 = vst.msk [vmem:[#allocation3 + $0x58] sm:$0xff] %vm532, %v958
    %v971 = vsel %vm114, %v962, %v957
    %v972 = vsel %vm114, %v964, %v958
    %v973 = vpack.c.bf16 %v972, %v971
    %v975 = vsel %vm318, %v973, 0
    %977 = vmatpush.bf16.msra.mxu0 0
    %978 = vmatpush.bf16.msra.mxu0 0
    %979 = vmatpush.bf16.msra.mxu0 0
    %980 = vmatpush.bf16.msra.mxu0 0
    %981 = vmatpush.bf16.msra.mxu0 %v308
    %982 = vmatpush.bf16.msra.mxu0 %v306
    %983 = vmatpush.bf16.msra.mxu0 %v304
    %984 = vmatpush.bf16.msra.mxu0 %v302
    %985 = vmatmul.bf16.gmra.mxu0 %v975
    %v986 = vpop.f32.mrf.mxu0
    %v987 = vadd.f32 0.0, %v986
    %v988 = vpop.f32.mrf.mxu0
    %v989 = vadd.f32 0.0, %v988
    %990 = vdwg.mxu0
    %991 = vmatpush.bf16.msra.mxu0 0
    %992 = vmatpush.bf16.msra.mxu0 0
    %993 = vmatpush.bf16.msra.mxu0 0
    %994 = vmatpush.bf16.msra.mxu0 0
    %995 = vmatpush.bf16.msra.mxu0 %v309
    %996 = vmatpush.bf16.msra.mxu0 %v307
    %997 = vmatpush.bf16.msra.mxu0 %v305
    %998 = vmatpush.bf16.msra.mxu0 %v303
    %999 = vmatmul.bf16.gmra.mxu0 %v975
    %v1000 = vpop.f32.mrf.mxu0
    %v1001 = vadd.f32 0.0, %v1000
    %v1002 = vpop.f32.mrf.mxu0
    %v1003 = vadd.f32 0.0, %v1002
    %1004 = vdwg.mxu0
    %v1005 = vld [vmem:[#allocation2 + $0x60] sm:$0xff]
    %v1006 = vld [vmem:[#allocation2 + $0x70] sm:$0xff]
    %v1007 = vld [vmem:[#allocation2 + $0x88] sm:$0xff]
    %v1008 = vld [vmem:[#allocation2 + $0x98] sm:$0xff]
    %v1009 = vadd.f32 %v1005, %v987
    %v1010 = vadd.f32 %v1006, %v989
    %v1011 = vxor.u32 %v1009, 2147483648
    %v1012 = vxor.u32 %v1010, 2147483648
    %v1013 = vmul.f32 %v1011, 1.442695
    %v1014 = vpow.pop %v1013
    %v1015 = vmul.f32 %v1012, 1.442695
    %v1016 = vpow.pop %v1015
    %v1017 = vadd.f32 %v1014, 1.0
    %v1018 = vadd.f32 %v1016, 1.0
    %v1019 = vrcp.pop %v1017
    %v1020 = vmul.f32 %v1017, %v1019
    %v1021 = vsub.f32 1.0, %v1020
    %v1022 = vmul.f32 %v1019, %v1021
    %v1023 = vadd.f32 %v1019, %v1022
    %vm1024 = vweird.f32 %v1017
    %vm1025 = vweird.f32 %v1019
    %vm1026 = vmor %vm1024, %vm1025
    %v1027 = vsel %vm1026, %v1019, %v1023
    %v1028 = vand.u32 2147483647, %v1017
    %vm1029 = vcmp.eq.f32.partialorder %v1028, 8.507059e+37
    %v1030 = vand.u32 %v1017, 2147483648
    %v1031 = vor.u32 1.1754944e-38, %v1030
    %v1032 = vsel %vm1029, %v1031, %v1027
    %v1033 = vmul.f32 1.0, %v1032
    %v1034 = vrcp.pop %v1018
    %v1035 = vmul.f32 %v1018, %v1034
    %v1036 = vsub.f32 1.0, %v1035
    %v1037 = vmul.f32 %v1034, %v1036
    %v1038 = vadd.f32 %v1034, %v1037
    %vm1039 = vweird.f32 %v1018
    %vm1040 = vweird.f32 %v1034
    %vm1041 = vmor %vm1039, %vm1040
    %v1042 = vsel %vm1041, %v1034, %v1038
    %v1043 = vand.u32 2147483647, %v1018
    %vm1044 = vcmp.eq.f32.partialorder %v1043, 8.507059e+37
    %v1045 = vand.u32 %v1018, 2147483648
    %v1046 = vor.u32 1.1754944e-38, %v1045
    %v1047 = vsel %vm1044, %v1046, %v1042
    %v1048 = vmul.f32 1.0, %v1047
    %v1049 = vadd.f32 %v987, %v397
    %v1050 = vadd.f32 %v989, %v397
    %1053 = vrot.lane.b32.xlu0 %v1049, 64
    %v1054 = vpop.permute.xlu0 %1053
    %1055 = vrot.lane.b32.xlu0 %v1050, 64
    %v1056 = vpop.permute.xlu0 %1055
    %v1059 = vmul.f32 %v1033, %v1054
    %v1060 = vmul.f32 %v1048, %v1056
    %1063 = vrot.lane.b32.xlu0 %v1059, 64
    %v1064 = vpop.permute.xlu0 %1063
    %1065 = vrot.lane.b32.xlu0 %v1060, 64
    %v1066 = vpop.permute.xlu0 %1065
    %v1069 = vadd.f32 %v1005, %v1064
    %v1070 = vadd.f32 %v1006, %v1066
    %v1071 = vtanh.pop %v1069
    %v1072 = vtanh.pop %v1070
    %v1073 = vsub.f32 1.0, %v1033
    %v1074 = vsub.f32 1.0, %v1048
    %1077 = vrot.lane.b32.xlu0 %v1071, 96
    %v1078 = vpop.permute.xlu0 %1077
    %1079 = vrot.lane.b32.xlu0 %v1072, 96
    %v1080 = vpop.permute.xlu0 %1079
    %v1083 = vmul.f32 %v1073, %v1078
    %v1084 = vmul.f32 %v1074, %v1080
    %1087 = vrot.lane.b32.xlu0 %v971, 32
    %v1088 = vpop.permute.xlu0 %1087
    %1089 = vrot.lane.b32.xlu0 %v972, 32
    %v1090 = vpop.permute.xlu0 %1089
    %v1093 = vmul.f32 %v1033, %v1088
    %v1094 = vmul.f32 %v1048, %v1090
    %v1095 = vadd.f32 %v1083, %v1093
    %v1096 = vadd.f32 %v1084, %v1094
    %v1097 = vadd.f32 %v1007, %v1001
    %v1098 = vadd.f32 %v1008, %v1003
    %v1099 = vxor.u32 %v1097, 2147483648
    %v1100 = vxor.u32 %v1098, 2147483648
    %v1101 = vmul.f32 %v1099, 1.442695
    %v1102 = vpow.pop %v1101
    %v1103 = vmul.f32 %v1100, 1.442695
    %v1104 = vpow.pop %v1103
    %v1105 = vadd.f32 %v1102, 1.0
    %v1106 = vadd.f32 %v1104, 1.0
    %v1107 = vrcp.pop %v1105
    %v1108 = vmul.f32 %v1105, %v1107
    %v1109 = vsub.f32 1.0, %v1108
    %v1110 = vmul.f32 %v1107, %v1109
    %v1111 = vadd.f32 %v1107, %v1110
    %vm1112 = vweird.f32 %v1105
    %vm1113 = vweird.f32 %v1107
    %vm1114 = vmor %vm1112, %vm1113
    %v1115 = vsel %vm1114, %v1107, %v1111
    %v1116 = vand.u32 2147483647, %v1105
    %vm1117 = vcmp.eq.f32.partialorder %v1116, 8.507059e+37
    %v1118 = vand.u32 %v1105, 2147483648
    %v1119 = vor.u32 1.1754944e-38, %v1118
    %v1120 = vsel %vm1117, %v1119, %v1115
    %v1121 = vmul.f32 1.0, %v1120
    %v1122 = vrcp.pop %v1106
    %v1123 = vmul.f32 %v1106, %v1122
    %v1124 = vsub.f32 1.0, %v1123
    %v1125 = vmul.f32 %v1122, %v1124
    %v1126 = vadd.f32 %v1122, %v1125
    %vm1127 = vweird.f32 %v1106
    %vm1128 = vweird.f32 %v1122
    %vm1129 = vmor %vm1127, %vm1128
    %v1130 = vsel %vm1129, %v1122, %v1126
    %v1131 = vand.u32 2147483647, %v1106
    %vm1132 = vcmp.eq.f32.partialorder %v1131, 8.507059e+37
    %v1133 = vand.u32 %v1106, 2147483648
    %v1134 = vor.u32 1.1754944e-38, %v1133
    %v1135 = vsel %vm1132, %v1134, %v1130
    %v1136 = vmul.f32 1.0, %v1135
    %v1137 = vadd.f32 %v1001, %v480
    %v1138 = vadd.f32 %v1003, %v480
    %1141 = vrot.lane.b32.xlu0 %v1137, 64
    %v1142 = vpop.permute.xlu0 %1141
    %1143 = vrot.lane.b32.xlu0 %v1138, 64
    %v1144 = vpop.permute.xlu0 %1143
    %v1147 = vmul.f32 %v1121, %v1142
    %v1148 = vmul.f32 %v1136, %v1144
    %1151 = vrot.lane.b32.xlu0 %v1147, 64
    %v1152 = vpop.permute.xlu0 %1151
    %1153 = vrot.lane.b32.xlu0 %v1148, 64
    %v1154 = vpop.permute.xlu0 %1153
    %v1157 = vadd.f32 %v1007, %v1152
    %v1158 = vadd.f32 %v1008, %v1154
    %v1159 = vtanh.pop %v1157
    %v1160 = vtanh.pop %v1158
    %v1161 = vsub.f32 1.0, %v1121
    %v1162 = vsub.f32 1.0, %v1136
    %1165 = vrot.lane.b32.xlu0 %v1159, 96
    %v1166 = vpop.permute.xlu0 %1165
    %1167 = vrot.lane.b32.xlu0 %v1160, 96
    %v1168 = vpop.permute.xlu0 %1167
    %v1171 = vmul.f32 %v1161, %v1166
    %v1172 = vmul.f32 %v1162, %v1168
    %v1173 = vmul.f32 %v1121, %v971
    %v1174 = vmul.f32 %v1136, %v972
    %v1175 = vadd.f32 %v1171, %v1173
    %v1176 = vadd.f32 %v1172, %v1174
    %1179 = vrot.lane.b32.xlu0 %v1095, 96
    %v1180 = vpop.permute.xlu0 %1179
    %1181 = vrot.lane.b32.xlu0 %v1096, 96
    %v1182 = vpop.permute.xlu0 %1181
    %1185 = vst.msk [vmem:[#allocation3 + $0x30] sm:$0xff] %vm114, %v1180
    %1186 = vst.msk [vmem:[#allocation3 + $0x38] sm:$0xff] %vm114, %v1182
    %1187 = vst.msk [vmem:[#allocation3 + $0x40] sm:$0xff] %vm532, %v1175
    %1188 = vst.msk [vmem:[#allocation3 + $0x48] sm:$0xff] %vm532, %v1176
    %v1189 = vsel %vm114, %v1180, %v1175
    %v1190 = vsel %vm114, %v1182, %v1176
    %v1191 = vpack.c.bf16 %v1190, %v1189
    %v1193 = vsel %vm318, %v1191, 0
    %1195 = vmatpush.bf16.msra.mxu0 0
    %1196 = vmatpush.bf16.msra.mxu0 0
    %1197 = vmatpush.bf16.msra.mxu0 0
    %1198 = vmatpush.bf16.msra.mxu0 0
    %1199 = vmatpush.bf16.msra.mxu0 %v308
    %1200 = vmatpush.bf16.msra.mxu0 %v306
    %1201 = vmatpush.bf16.msra.mxu0 %v304
    %1202 = vmatpush.bf16.msra.mxu0 %v302
    %1203 = vmatmul.bf16.gmra.mxu0 %v1193
    %v1204 = vpop.f32.mrf.mxu0
    %v1205 = vadd.f32 0.0, %v1204
    %v1206 = vpop.f32.mrf.mxu0
    %v1207 = vadd.f32 0.0, %v1206
    %1208 = vdwg.mxu0
    %1209 = vmatpush.bf16.msra.mxu0 0
    %1210 = vmatpush.bf16.msra.mxu0 0
    %1211 = vmatpush.bf16.msra.mxu0 0
    %1212 = vmatpush.bf16.msra.mxu0 0
    %1213 = vmatpush.bf16.msra.mxu0 %v309
    %1214 = vmatpush.bf16.msra.mxu0 %v307
    %1215 = vmatpush.bf16.msra.mxu0 %v305
    %1216 = vmatpush.bf16.msra.mxu0 %v303
    %1217 = vmatmul.bf16.gmra.mxu0 %v1193
    %v1218 = vpop.f32.mrf.mxu0
    %v1219 = vadd.f32 0.0, %v1218
    %v1220 = vpop.f32.mrf.mxu0
    %v1221 = vadd.f32 0.0, %v1220
    %1222 = vdwg.mxu0
    %v1223 = vld [vmem:[#allocation2 + $0x80] sm:$0xff]
    %v1224 = vld [vmem:[#allocation2 + $0x90] sm:$0xff]
    %v1225 = vld [vmem:[#allocation2 + $0x68] sm:$0xff]
    %v1226 = vld [vmem:[#allocation2 + $0x78] sm:$0xff]
    %v1227 = vadd.f32 %v1223, %v1205
    %v1228 = vadd.f32 %v1224, %v1207
    %v1229 = vxor.u32 %v1227, 2147483648
    %v1230 = vxor.u32 %v1228, 2147483648
    %v1231 = vmul.f32 %v1229, 1.442695
    %v1232 = vpow.pop %v1231
    %v1233 = vmul.f32 %v1230, 1.442695
    %v1234 = vpow.pop %v1233
    %v1235 = vadd.f32 %v1232, 1.0
    %v1236 = vadd.f32 %v1234, 1.0
    %v1237 = vrcp.pop %v1235
    %v1238 = vmul.f32 %v1235, %v1237
    %v1239 = vsub.f32 1.0, %v1238
    %v1240 = vmul.f32 %v1237, %v1239
    %v1241 = vadd.f32 %v1237, %v1240
    %vm1242 = vweird.f32 %v1235
    %vm1243 = vweird.f32 %v1237
    %vm1244 = vmor %vm1242, %vm1243
    %v1245 = vsel %vm1244, %v1237, %v1241
    %v1246 = vand.u32 2147483647, %v1235
    %vm1247 = vcmp.eq.f32.partialorder %v1246, 8.507059e+37
    %v1248 = vand.u32 %v1235, 2147483648
    %v1249 = vor.u32 1.1754944e-38, %v1248
    %v1250 = vsel %vm1247, %v1249, %v1245
    %v1251 = vmul.f32 1.0, %v1250
    %v1252 = vrcp.pop %v1236
    %v1253 = vmul.f32 %v1236, %v1252
    %v1254 = vsub.f32 1.0, %v1253
    %v1255 = vmul.f32 %v1252, %v1254
    %v1256 = vadd.f32 %v1252, %v1255
    %vm1257 = vweird.f32 %v1236
    %vm1258 = vweird.f32 %v1252
    %vm1259 = vmor %vm1257, %vm1258
    %v1260 = vsel %vm1259, %v1252, %v1256
    %v1261 = vand.u32 2147483647, %v1236
    %vm1262 = vcmp.eq.f32.partialorder %v1261, 8.507059e+37
    %v1263 = vand.u32 %v1236, 2147483648
    %v1264 = vor.u32 1.1754944e-38, %v1263
    %v1265 = vsel %vm1262, %v1264, %v1260
    %v1266 = vmul.f32 1.0, %v1265
    %v1267 = vadd.f32 %v1205, %v397
    %v1268 = vadd.f32 %v1207, %v397
    %1271 = vrot.lane.b32.xlu0 %v1267, 64
    %v1272 = vpop.permute.xlu0 %1271
    %1273 = vrot.lane.b32.xlu0 %v1268, 64
    %v1274 = vpop.permute.xlu0 %1273
    %v1277 = vmul.f32 %v1251, %v1272
    %v1278 = vmul.f32 %v1266, %v1274
    %1281 = vrot.lane.b32.xlu0 %v1277, 64
    %v1282 = vpop.permute.xlu0 %1281
    %1283 = vrot.lane.b32.xlu0 %v1278, 64
    %v1284 = vpop.permute.xlu0 %1283
    %v1287 = vadd.f32 %v1223, %v1282
    %v1288 = vadd.f32 %v1224, %v1284
    %v1289 = vtanh.pop %v1287
    %v1290 = vtanh.pop %v1288
    %v1291 = vsub.f32 1.0, %v1251
    %v1292 = vsub.f32 1.0, %v1266
    %1295 = vrot.lane.b32.xlu0 %v1289, 96
    %v1296 = vpop.permute.xlu0 %1295
    %1297 = vrot.lane.b32.xlu0 %v1290, 96
    %v1298 = vpop.permute.xlu0 %1297
    %v1301 = vmul.f32 %v1291, %v1296
    %v1302 = vmul.f32 %v1292, %v1298
    %1305 = vrot.lane.b32.xlu0 %v1189, 32
    %v1306 = vpop.permute.xlu0 %1305
    %1307 = vrot.lane.b32.xlu0 %v1190, 32
    %v1308 = vpop.permute.xlu0 %1307
    %v1311 = vmul.f32 %v1251, %v1306
    %v1312 = vmul.f32 %v1266, %v1308
    %v1313 = vadd.f32 %v1301, %v1311
    %v1314 = vadd.f32 %v1302, %v1312
    %v1315 = vadd.f32 %v1225, %v1219
    %v1316 = vadd.f32 %v1226, %v1221
    %v1317 = vxor.u32 %v1315, 2147483648
    %v1318 = vxor.u32 %v1316, 2147483648
    %v1319 = vmul.f32 %v1317, 1.442695
    %v1320 = vpow.pop %v1319
    %v1321 = vmul.f32 %v1318, 1.442695
    %v1322 = vpow.pop %v1321
    %v1323 = vadd.f32 %v1320, 1.0
    %v1324 = vadd.f32 %v1322, 1.0
    %v1325 = vrcp.pop %v1323
    %v1326 = vmul.f32 %v1323, %v1325
    %v1327 = vsub.f32 1.0, %v1326
    %v1328 = vmul.f32 %v1325, %v1327
    %v1329 = vadd.f32 %v1325, %v1328
    %vm1330 = vweird.f32 %v1323
    %vm1331 = vweird.f32 %v1325
    %vm1332 = vmor %vm1330, %vm1331
    %v1333 = vsel %vm1332, %v1325, %v1329
    %v1334 = vand.u32 2147483647, %v1323
    %vm1335 = vcmp.eq.f32.partialorder %v1334, 8.507059e+37
    %v1336 = vand.u32 %v1323, 2147483648
    %v1337 = vor.u32 1.1754944e-38, %v1336
    %v1338 = vsel %vm1335, %v1337, %v1333
    %v1339 = vmul.f32 1.0, %v1338
    %v1340 = vrcp.pop %v1324
    %v1341 = vmul.f32 %v1324, %v1340
    %v1342 = vsub.f32 1.0, %v1341
    %v1343 = vmul.f32 %v1340, %v1342
    %v1344 = vadd.f32 %v1340, %v1343
    %vm1345 = vweird.f32 %v1324
    %vm1346 = vweird.f32 %v1340
    %vm1347 = vmor %vm1345, %vm1346
    %v1348 = vsel %vm1347, %v1340, %v1344
    %v1349 = vand.u32 2147483647, %v1324
    %vm1350 = vcmp.eq.f32.partialorder %v1349, 8.507059e+37
    %v1351 = vand.u32 %v1324, 2147483648
    %v1352 = vor.u32 1.1754944e-38, %v1351
    %v1353 = vsel %vm1350, %v1352, %v1348
    %v1354 = vmul.f32 1.0, %v1353
    %v1355 = vadd.f32 %v1219, %v480
    %v1356 = vadd.f32 %v1221, %v480
    %1359 = vrot.lane.b32.xlu0 %v1355, 64
    %v1360 = vpop.permute.xlu0 %1359
    %1361 = vrot.lane.b32.xlu0 %v1356, 64
    %v1362 = vpop.permute.xlu0 %1361
    %v1365 = vmul.f32 %v1339, %v1360
    %v1366 = vmul.f32 %v1354, %v1362
    %1369 = vrot.lane.b32.xlu0 %v1365, 64
    %v1370 = vpop.permute.xlu0 %1369
    %1371 = vrot.lane.b32.xlu0 %v1366, 64
    %v1372 = vpop.permute.xlu0 %1371
    %v1375 = vadd.f32 %v1225, %v1370
    %v1376 = vadd.f32 %v1226, %v1372
    %v1377 = vtanh.pop %v1375
    %v1378 = vtanh.pop %v1376
    %v1379 = vsub.f32 1.0, %v1339
    %v1380 = vsub.f32 1.0, %v1354
    %1383 = vrot.lane.b32.xlu0 %v1377, 96
    %v1384 = vpop.permute.xlu0 %1383
    %1385 = vrot.lane.b32.xlu0 %v1378, 96
    %v1386 = vpop.permute.xlu0 %1385
    %v1389 = vmul.f32 %v1379, %v1384
    %v1390 = vmul.f32 %v1380, %v1386
    %v1391 = vmul.f32 %v1339, %v1189
    %v1392 = vmul.f32 %v1354, %v1190
    %v1393 = vadd.f32 %v1389, %v1391
    %v1394 = vadd.f32 %v1390, %v1392
    %1397 = vrot.lane.b32.xlu0 %v1313, 96
    %v1398 = vpop.permute.xlu0 %1397
    %1399 = vrot.lane.b32.xlu0 %v1314, 96
    %v1400 = vpop.permute.xlu0 %1399
    %1403 = vst.msk [vmem:[#allocation3 + $0x40] sm:$0xff] %vm114, %v1398
    %1404 = vst.msk [vmem:[#allocation3 + $0x48] sm:$0xff] %vm114, %v1400
    %1405 = vst.msk [vmem:[#allocation3 + $0x30] sm:$0xff] %vm532, %v1393
    %1406 = vst.msk [vmem:[#allocation3 + $0x38] sm:$0xff] %vm532, %v1394
    %v1407 = vsel %vm114, %v1398, %v1393
    %v1408 = vsel %vm114, %v1400, %v1394
    %v1409 = vpack.c.bf16 %v1408, %v1407
    %v1411 = vsel %vm318, %v1409, 0
    %1413 = vmatpush.bf16.msra.mxu0 0
    %1414 = vmatpush.bf16.msra.mxu0 0
    %1415 = vmatpush.bf16.msra.mxu0 0
    %1416 = vmatpush.bf16.msra.mxu0 0
    %1417 = vmatpush.bf16.msra.mxu0 %v308
    %1418 = vmatpush.bf16.msra.mxu0 %v306
    %1419 = vmatpush.bf16.msra.mxu0 %v304
    %1420 = vmatpush.bf16.msra.mxu0 %v302
    %1421 = vmatmul.bf16.gmra.mxu0 %v1411
    %v1422 = vpop.f32.mrf.mxu0
    %v1423 = vadd.f32 0.0, %v1422
    %v1424 = vpop.f32.mrf.mxu0
    %v1425 = vadd.f32 0.0, %v1424
    %1426 = vdwg.mxu0
    %1427 = vmatpush.bf16.msra.mxu0 0
    %1428 = vmatpush.bf16.msra.mxu0 0
    %1429 = vmatpush.bf16.msra.mxu0 0
    %1430 = vmatpush.bf16.msra.mxu0 0
    %1431 = vmatpush.bf16.msra.mxu0 %v309
    %1432 = vmatpush.bf16.msra.mxu0 %v307
    %1433 = vmatpush.bf16.msra.mxu0 %v305
    %1434 = vmatpush.bf16.msra.mxu0 %v303
    %1435 = vmatmul.bf16.gmra.mxu0 %v1411
    %v1436 = vpop.f32.mrf.mxu0
    %v1437 = vadd.f32 0.0, %v1436
    %v1438 = vpop.f32.mrf.mxu0
    %v1439 = vadd.f32 0.0, %v1438
    %1440 = vdwg.mxu0
    %v1441 = vld [vmem:[#allocation2 + $0xa0] sm:$0xff]
    %v1442 = vld [vmem:[#allocation2 + $0xb0] sm:$0xff]
    %v1443 = vld [vmem:[#allocation2 + $0x48] sm:$0xff]
    %v1444 = vld [vmem:[#allocation2 + $0x58] sm:$0xff]
    %v1445 = vadd.f32 %v1441, %v1423
    %v1446 = vadd.f32 %v1442, %v1425
    %v1447 = vxor.u32 %v1445, 2147483648
    %v1448 = vxor.u32 %v1446, 2147483648
    %v1449 = vmul.f32 %v1447, 1.442695
    %v1450 = vpow.pop %v1449
    %v1451 = vmul.f32 %v1448, 1.442695
    %v1452 = vpow.pop %v1451
    %v1453 = vadd.f32 %v1450, 1.0
    %v1454 = vadd.f32 %v1452, 1.0
    %v1455 = vrcp.pop %v1453
    %v1456 = vmul.f32 %v1453, %v1455
    %v1457 = vsub.f32 1.0, %v1456
    %v1458 = vmul.f32 %v1455, %v1457
    %v1459 = vadd.f32 %v1455, %v1458
    %vm1460 = vweird.f32 %v1453
    %vm1461 = vweird.f32 %v1455
    %vm1462 = vmor %vm1460, %vm1461
    %v1463 = vsel %vm1462, %v1455, %v1459
    %v1464 = vand.u32 2147483647, %v1453
    %vm1465 = vcmp.eq.f32.partialorder %v1464, 8.507059e+37
    %v1466 = vand.u32 %v1453, 2147483648
    %v1467 = vor.u32 1.1754944e-38, %v1466
    %v1468 = vsel %vm1465, %v1467, %v1463
    %v1469 = vmul.f32 1.0, %v1468
    %v1470 = vrcp.pop %v1454
    %v1471 = vmul.f32 %v1454, %v1470
    %v1472 = vsub.f32 1.0, %v1471
    %v1473 = vmul.f32 %v1470, %v1472
    %v1474 = vadd.f32 %v1470, %v1473
    %vm1475 = vweird.f32 %v1454
    %vm1476 = vweird.f32 %v1470
    %vm1477 = vmor %vm1475, %vm1476
    %v1478 = vsel %vm1477, %v1470, %v1474
    %v1479 = vand.u32 2147483647, %v1454
    %vm1480 = vcmp.eq.f32.partialorder %v1479, 8.507059e+37
    %v1481 = vand.u32 %v1454, 2147483648
    %v1482 = vor.u32 1.1754944e-38, %v1481
    %v1483 = vsel %vm1480, %v1482, %v1478
    %v1484 = vmul.f32 1.0, %v1483
    %v1485 = vadd.f32 %v1423, %v397
    %v1486 = vadd.f32 %v1425, %v397
    %1489 = vrot.lane.b32.xlu0 %v1485, 64
    %v1490 = vpop.permute.xlu0 %1489
    %1491 = vrot.lane.b32.xlu0 %v1486, 64
    %v1492 = vpop.permute.xlu0 %1491
    %v1495 = vmul.f32 %v1469, %v1490
    %v1496 = vmul.f32 %v1484, %v1492
    %1499 = vrot.lane.b32.xlu0 %v1495, 64
    %v1500 = vpop.permute.xlu0 %1499
    %1501 = vrot.lane.b32.xlu0 %v1496, 64
    %v1502 = vpop.permute.xlu0 %1501
    %v1505 = vadd.f32 %v1441, %v1500
    %v1506 = vadd.f32 %v1442, %v1502
    %v1507 = vtanh.pop %v1505
    %v1508 = vtanh.pop %v1506
    %v1509 = vsub.f32 1.0, %v1469
    %v1510 = vsub.f32 1.0, %v1484
    %1513 = vrot.lane.b32.xlu0 %v1507, 96
    %v1514 = vpop.permute.xlu0 %1513
    %1515 = vrot.lane.b32.xlu0 %v1508, 96
    %v1516 = vpop.permute.xlu0 %1515
    %v1519 = vmul.f32 %v1509, %v1514
    %v1520 = vmul.f32 %v1510, %v1516
    %1523 = vrot.lane.b32.xlu0 %v1407, 32
    %v1524 = vpop.permute.xlu0 %1523
    %1525 = vrot.lane.b32.xlu0 %v1408, 32
    %v1526 = vpop.permute.xlu0 %1525
    %v1529 = vmul.f32 %v1469, %v1524
    %v1530 = vmul.f32 %v1484, %v1526
    %v1531 = vadd.f32 %v1519, %v1529
    %v1532 = vadd.f32 %v1520, %v1530
    %v1533 = vadd.f32 %v1443, %v1437
    %v1534 = vadd.f32 %v1444, %v1439
    %v1535 = vxor.u32 %v1533, 2147483648
    %v1536 = vxor.u32 %v1534, 2147483648
    %v1537 = vmul.f32 %v1535, 1.442695
    %v1538 = vpow.pop %v1537
    %v1539 = vmul.f32 %v1536, 1.442695
    %v1540 = vpow.pop %v1539
    %v1541 = vadd.f32 %v1538, 1.0
    %v1542 = vadd.f32 %v1540, 1.0
    %v1543 = vrcp.pop %v1541
    %v1544 = vmul.f32 %v1541, %v1543
    %v1545 = vsub.f32 1.0, %v1544
    %v1546 = vmul.f32 %v1543, %v1545
    %v1547 = vadd.f32 %v1543, %v1546
    %vm1548 = vweird.f32 %v1541
    %vm1549 = vweird.f32 %v1543
    %vm1550 = vmor %vm1548, %vm1549
    %v1551 = vsel %vm1550, %v1543, %v1547
    %v1552 = vand.u32 2147483647, %v1541
    %vm1553 = vcmp.eq.f32.partialorder %v1552, 8.507059e+37
    %v1554 = vand.u32 %v1541, 2147483648
    %v1555 = vor.u32 1.1754944e-38, %v1554
    %v1556 = vsel %vm1553, %v1555, %v1551
    %v1557 = vmul.f32 1.0, %v1556
    %v1558 = vrcp.pop %v1542
    %v1559 = vmul.f32 %v1542, %v1558
    %v1560 = vsub.f32 1.0, %v1559
    %v1561 = vmul.f32 %v1558, %v1560
    %v1562 = vadd.f32 %v1558, %v1561
    %vm1563 = vweird.f32 %v1542
    %vm1564 = vweird.f32 %v1558
    %vm1565 = vmor %vm1563, %vm1564
    %v1566 = vsel %vm1565, %v1558, %v1562
    %v1567 = vand.u32 2147483647, %v1542
    %vm1568 = vcmp.eq.f32.partialorder %v1567, 8.507059e+37
    %v1569 = vand.u32 %v1542, 2147483648
    %v1570 = vor.u32 1.1754944e-38, %v1569
    %v1571 = vsel %vm1568, %v1570, %v1566
    %v1572 = vmul.f32 1.0, %v1571
    %v1573 = vadd.f32 %v1437, %v480
    %v1574 = vadd.f32 %v1439, %v480
    %1577 = vrot.lane.b32.xlu0 %v1573, 64
    %v1578 = vpop.permute.xlu0 %1577
    %1579 = vrot.lane.b32.xlu0 %v1574, 64
    %v1580 = vpop.permute.xlu0 %1579
    %v1583 = vmul.f32 %v1557, %v1578
    %v1584 = vmul.f32 %v1572, %v1580
    %1587 = vrot.lane.b32.xlu0 %v1583, 64
    %v1588 = vpop.permute.xlu0 %1587
    %1589 = vrot.lane.b32.xlu0 %v1584, 64
    %v1590 = vpop.permute.xlu0 %1589
    %v1593 = vadd.f32 %v1443, %v1588
    %v1594 = vadd.f32 %v1444, %v1590
    %v1595 = vtanh.pop %v1593
    %v1596 = vtanh.pop %v1594
    %v1597 = vsub.f32 1.0, %v1557
    %v1598 = vsub.f32 1.0, %v1572
    %1601 = vrot.lane.b32.xlu0 %v1595, 96
    %v1602 = vpop.permute.xlu0 %1601
    %1603 = vrot.lane.b32.xlu0 %v1596, 96
    %v1604 = vpop.permute.xlu0 %1603
    %v1607 = vmul.f32 %v1597, %v1602
    %v1608 = vmul.f32 %v1598, %v1604
    %v1609 = vmul.f32 %v1557, %v1407
    %v1610 = vmul.f32 %v1572, %v1408
    %v1611 = vadd.f32 %v1607, %v1609
    %v1612 = vadd.f32 %v1608, %v1610
    %1615 = vrot.lane.b32.xlu0 %v1531, 96
    %v1616 = vpop.permute.xlu0 %1615
    %1617 = vrot.lane.b32.xlu0 %v1532, 96
    %v1618 = vpop.permute.xlu0 %1617
    %1621 = vst.msk [vmem:[#allocation3 + $0x50] sm:$0xff] %vm114, %v1616
    %1622 = vst.msk [vmem:[#allocation3 + $0x58] sm:$0xff] %vm114, %v1618
    %1623 = vst.msk [vmem:[#allocation3 + $0x20] sm:$0xff] %vm532, %v1611
    %1624 = vst.msk [vmem:[#allocation3 + $0x28] sm:$0xff] %vm532, %v1612
    %v1625 = vsel %vm114, %v1616, %v1611
    %v1626 = vsel %vm114, %v1618, %v1612
    %v1627 = vpack.c.bf16 %v1626, %v1625
    %v1629 = vsel %vm318, %v1627, 0
    %1631 = vmatpush.bf16.msra.mxu0 0
    %1632 = vmatpush.bf16.msra.mxu0 0
    %1633 = vmatpush.bf16.msra.mxu0 0
    %1634 = vmatpush.bf16.msra.mxu0 0
    %1635 = vmatpush.bf16.msra.mxu0 %v308
    %1636 = vmatpush.bf16.msra.mxu0 %v306
    %1637 = vmatpush.bf16.msra.mxu0 %v304
    %1638 = vmatpush.bf16.msra.mxu0 %v302
    %1639 = vmatmul.bf16.gmra.mxu0 %v1629
    %v1640 = vpop.f32.mrf.mxu0
    %v1641 = vadd.f32 0.0, %v1640
    %v1642 = vpop.f32.mrf.mxu0
    %v1643 = vadd.f32 0.0, %v1642
    %1644 = vdwg.mxu0
    %1645 = vmatpush.bf16.msra.mxu0 0
    %1646 = vmatpush.bf16.msra.mxu0 0
    %1647 = vmatpush.bf16.msra.mxu0 0
    %1648 = vmatpush.bf16.msra.mxu0 0
    %1649 = vmatpush.bf16.msra.mxu0 %v309
    %1650 = vmatpush.bf16.msra.mxu0 %v307
    %1651 = vmatpush.bf16.msra.mxu0 %v305
    %1652 = vmatpush.bf16.msra.mxu0 %v303
    %1653 = vmatmul.bf16.gmra.mxu0 %v1629
    %v1654 = vpop.f32.mrf.mxu0
    %v1655 = vadd.f32 0.0, %v1654
    %v1656 = vpop.f32.mrf.mxu0
    %v1657 = vadd.f32 0.0, %v1656
    %1658 = vdwg.mxu0
    %v1659 = vld [vmem:[#allocation2 + $0xc0] sm:$0xff]
    %v1660 = vld [vmem:[#allocation2 + $0xd0] sm:$0xff]
    %v1661 = vld [vmem:[#allocation2 + $0x28] sm:$0xff]
    %v1662 = vld [vmem:[#allocation2 + $0x38] sm:$0xff]
    %v1663 = vadd.f32 %v1659, %v1641
    %v1664 = vadd.f32 %v1660, %v1643
    %v1665 = vxor.u32 %v1663, 2147483648
    %v1666 = vxor.u32 %v1664, 2147483648
    %v1667 = vmul.f32 %v1665, 1.442695
    %v1668 = vpow.pop %v1667
    %v1669 = vmul.f32 %v1666, 1.442695
    %v1670 = vpow.pop %v1669
    %v1671 = vadd.f32 %v1668, 1.0
    %v1672 = vadd.f32 %v1670, 1.0
    %v1673 = vrcp.pop %v1671
    %v1674 = vmul.f32 %v1671, %v1673
    %v1675 = vsub.f32 1.0, %v1674
    %v1676 = vmul.f32 %v1673, %v1675
    %v1677 = vadd.f32 %v1673, %v1676
    %vm1678 = vweird.f32 %v1671
    %vm1679 = vweird.f32 %v1673
    %vm1680 = vmor %vm1678, %vm1679
    %v1681 = vsel %vm1680, %v1673, %v1677
    %v1682 = vand.u32 2147483647, %v1671
    %vm1683 = vcmp.eq.f32.partialorder %v1682, 8.507059e+37
    %v1684 = vand.u32 %v1671, 2147483648
    %v1685 = vor.u32 1.1754944e-38, %v1684
    %v1686 = vsel %vm1683, %v1685, %v1681
    %v1687 = vmul.f32 1.0, %v1686
    %v1688 = vrcp.pop %v1672
    %v1689 = vmul.f32 %v1672, %v1688
    %v1690 = vsub.f32 1.0, %v1689
    %v1691 = vmul.f32 %v1688, %v1690
    %v1692 = vadd.f32 %v1688, %v1691
    %vm1693 = vweird.f32 %v1672
    %vm1694 = vweird.f32 %v1688
    %vm1695 = vmor %vm1693, %vm1694
    %v1696 = vsel %vm1695, %v1688, %v1692
    %v1697 = vand.u32 2147483647, %v1672
    %vm1698 = vcmp.eq.f32.partialorder %v1697, 8.507059e+37
    %v1699 = vand.u32 %v1672, 2147483648
    %v1700 = vor.u32 1.1754944e-38, %v1699
    %v1701 = vsel %vm1698, %v1700, %v1696
    %v1702 = vmul.f32 1.0, %v1701
    %v1703 = vadd.f32 %v1641, %v397
    %v1704 = vadd.f32 %v1643, %v397
    %1707 = vrot.lane.b32.xlu0 %v1703, 64
    %v1708 = vpop.permute.xlu0 %1707
    %1709 = vrot.lane.b32.xlu0 %v1704, 64
    %v1710 = vpop.permute.xlu0 %1709
    %v1713 = vmul.f32 %v1687, %v1708
    %v1714 = vmul.f32 %v1702, %v1710
    %1717 = vrot.lane.b32.xlu0 %v1713, 64
    %v1718 = vpop.permute.xlu0 %1717
    %1719 = vrot.lane.b32.xlu0 %v1714, 64
    %v1720 = vpop.permute.xlu0 %1719
    %v1723 = vadd.f32 %v1659, %v1718
    %v1724 = vadd.f32 %v1660, %v1720
    %v1725 = vtanh.pop %v1723
    %v1726 = vtanh.pop %v1724
    %v1727 = vsub.f32 1.0, %v1687
    %v1728 = vsub.f32 1.0, %v1702
    %1731 = vrot.lane.b32.xlu0 %v1725, 96
    %v1732 = vpop.permute.xlu0 %1731
    %1733 = vrot.lane.b32.xlu0 %v1726, 96
    %v1734 = vpop.permute.xlu0 %1733
    %v1737 = vmul.f32 %v1727, %v1732
    %v1738 = vmul.f32 %v1728, %v1734
    %1741 = vrot.lane.b32.xlu0 %v1625, 32
    %v1742 = vpop.permute.xlu0 %1741
    %1743 = vrot.lane.b32.xlu0 %v1626, 32
    %v1744 = vpop.permute.xlu0 %1743
    %v1747 = vmul.f32 %v1687, %v1742
    %v1748 = vmul.f32 %v1702, %v1744
    %v1749 = vadd.f32 %v1737, %v1747
    %v1750 = vadd.f32 %v1738, %v1748
    %v1751 = vadd.f32 %v1661, %v1655
    %v1752 = vadd.f32 %v1662, %v1657
    %v1753 = vxor.u32 %v1751, 2147483648
    %v1754 = vxor.u32 %v1752, 2147483648
    %v1755 = vmul.f32 %v1753, 1.442695
    %v1756 = vpow.pop %v1755
    %v1757 = vmul.f32 %v1754, 1.442695
    %v1758 = vpow.pop %v1757
    %v1759 = vadd.f32 %v1756, 1.0
    %v1760 = vadd.f32 %v1758, 1.0
    %v1761 = vrcp.pop %v1759
    %v1762 = vmul.f32 %v1759, %v1761
    %v1763 = vsub.f32 1.0, %v1762
    %v1764 = vmul.f32 %v1761, %v1763
    %v1765 = vadd.f32 %v1761, %v1764
    %vm1766 = vweird.f32 %v1759
    %vm1767 = vweird.f32 %v1761
    %vm1768 = vmor %vm1766, %vm1767
    %v1769 = vsel %vm1768, %v1761, %v1765
    %v1770 = vand.u32 2147483647, %v1759
    %vm1771 = vcmp.eq.f32.partialorder %v1770, 8.507059e+37
    %v1772 = vand.u32 %v1759, 2147483648
    %v1773 = vor.u32 1.1754944e-38, %v1772
    %v1774 = vsel %vm1771, %v1773, %v1769
    %v1775 = vmul.f32 1.0, %v1774
    %v1776 = vrcp.pop %v1760
    %v1777 = vmul.f32 %v1760, %v1776
    %v1778 = vsub.f32 1.0, %v1777
    %v1779 = vmul.f32 %v1776, %v1778
    %v1780 = vadd.f32 %v1776, %v1779
    %vm1781 = vweird.f32 %v1760
    %vm1782 = vweird.f32 %v1776
    %vm1783 = vmor %vm1781, %vm1782
    %v1784 = vsel %vm1783, %v1776, %v1780
    %v1785 = vand.u32 2147483647, %v1760
    %vm1786 = vcmp.eq.f32.partialorder %v1785, 8.507059e+37
    %v1787 = vand.u32 %v1760, 2147483648
    %v1788 = vor.u32 1.1754944e-38, %v1787
    %v1789 = vsel %vm1786, %v1788, %v1784
    %v1790 = vmul.f32 1.0, %v1789
    %v1791 = vadd.f32 %v1655, %v480
    %v1792 = vadd.f32 %v1657, %v480
    %1795 = vrot.lane.b32.xlu0 %v1791, 64
    %v1796 = vpop.permute.xlu0 %1795
    %1797 = vrot.lane.b32.xlu0 %v1792, 64
    %v1798 = vpop.permute.xlu0 %1797
    %v1801 = vmul.f32 %v1775, %v1796
    %v1802 = vmul.f32 %v1790, %v1798
    %1805 = vrot.lane.b32.xlu0 %v1801, 64
    %v1806 = vpop.permute.xlu0 %1805
    %1807 = vrot.lane.b32.xlu0 %v1802, 64
    %v1808 = vpop.permute.xlu0 %1807
    %v1811 = vadd.f32 %v1661, %v1806
    %v1812 = vadd.f32 %v1662, %v1808
    %v1813 = vtanh.pop %v1811
    %v1814 = vtanh.pop %v1812
    %v1815 = vsub.f32 1.0, %v1775
    %v1816 = vsub.f32 1.0, %v1790
    %1819 = vrot.lane.b32.xlu0 %v1813, 96
    %v1820 = vpop.permute.xlu0 %1819
    %1821 = vrot.lane.b32.xlu0 %v1814, 96
    %v1822 = vpop.permute.xlu0 %1821
    %v1825 = vmul.f32 %v1815, %v1820
    %v1826 = vmul.f32 %v1816, %v1822
    %v1827 = vmul.f32 %v1775, %v1625
    %v1828 = vmul.f32 %v1790, %v1626
    %v1829 = vadd.f32 %v1825, %v1827
    %v1830 = vadd.f32 %v1826, %v1828
    %1833 = vrot.lane.b32.xlu0 %v1749, 96
    %v1834 = vpop.permute.xlu0 %1833
    %1835 = vrot.lane.b32.xlu0 %v1750, 96
    %v1836 = vpop.permute.xlu0 %1835
    %1839 = vst.msk [vmem:[#allocation3 + $0x60] sm:$0xff] %vm114, %v1834
    %1840 = vst.msk [vmem:[#allocation3 + $0x68] sm:$0xff] %vm114, %v1836
    %1841 = vst.msk [vmem:[#allocation3 + $0x10] sm:$0xff] %vm532, %v1829
    %1842 = vst.msk [vmem:[#allocation3 + $0x18] sm:$0xff] %vm532, %v1830
    %v1843 = vsel %vm114, %v1834, %v1829
    %v1844 = vsel %vm114, %v1836, %v1830
    %v1845 = vpack.c.bf16 %v1844, %v1843
    %v1847 = vsel %vm318, %v1845, 0
    %1849 = vmatpush.bf16.msra.mxu0 0
    %1850 = vmatpush.bf16.msra.mxu0 0
    %1851 = vmatpush.bf16.msra.mxu0 0
    %1852 = vmatpush.bf16.msra.mxu0 0
    %1853 = vmatpush.bf16.msra.mxu0 %v308
    %1854 = vmatpush.bf16.msra.mxu0 %v306
    %1855 = vmatpush.bf16.msra.mxu0 %v304
    %1856 = vmatpush.bf16.msra.mxu0 %v302
    %1857 = vmatmul.bf16.gmra.mxu0 %v1847
    %v1858 = vpop.f32.mrf.mxu0
    %v1859 = vadd.f32 0.0, %v1858
    %v1860 = vpop.f32.mrf.mxu0
    %v1861 = vadd.f32 0.0, %v1860
    %1862 = vdwg.mxu0
    %1863 = vmatpush.bf16.msra.mxu0 0
    %1864 = vmatpush.bf16.msra.mxu0 0
    %1865 = vmatpush.bf16.msra.mxu0 0
    %1866 = vmatpush.bf16.msra.mxu0 0
    %1867 = vmatpush.bf16.msra.mxu0 %v309
    %1868 = vmatpush.bf16.msra.mxu0 %v307
    %1869 = vmatpush.bf16.msra.mxu0 %v305
    %1870 = vmatpush.bf16.msra.mxu0 %v303
    %1871 = vmatmul.bf16.gmra.mxu0 %v1847
    %v1872 = vpop.f32.mrf.mxu0
    %v1873 = vadd.f32 0.0, %v1872
    %v1874 = vpop.f32.mrf.mxu0
    %v1875 = vadd.f32 0.0, %v1874
    %1876 = vdwg.mxu0
    %v1877 = vld [vmem:[#allocation2 + $0xe0] sm:$0xff]
    %v1878 = vld [vmem:[#allocation2 + $0xf0] sm:$0xff]
    %v1879 = vld [vmem:[#allocation2 + $0x8] sm:$0xff]
    %v1880 = vld [vmem:[#allocation2 + $0x18] sm:$0xff]
    %v1881 = vadd.f32 %v1877, %v1859
    %v1882 = vadd.f32 %v1878, %v1861
    %v1883 = vxor.u32 %v1881, 2147483648
    %v1884 = vxor.u32 %v1882, 2147483648
    %v1885 = vmul.f32 %v1883, 1.442695
    %v1886 = vpow.pop %v1885
    %v1887 = vmul.f32 %v1884, 1.442695
    %v1888 = vpow.pop %v1887
    %v1889 = vadd.f32 %v1886, 1.0
    %v1890 = vadd.f32 %v1888, 1.0
    %v1891 = vrcp.pop %v1889
    %v1892 = vmul.f32 %v1889, %v1891
    %v1893 = vsub.f32 1.0, %v1892
    %v1894 = vmul.f32 %v1891, %v1893
    %v1895 = vadd.f32 %v1891, %v1894
    %vm1896 = vweird.f32 %v1889
    %vm1897 = vweird.f32 %v1891
    %vm1898 = vmor %vm1896, %vm1897
    %v1899 = vsel %vm1898, %v1891, %v1895
    %v1900 = vand.u32 2147483647, %v1889
    %vm1901 = vcmp.eq.f32.partialorder %v1900, 8.507059e+37
    %v1902 = vand.u32 %v1889, 2147483648
    %v1903 = vor.u32 1.1754944e-38, %v1902
    %v1904 = vsel %vm1901, %v1903, %v1899
    %v1905 = vmul.f32 1.0, %v1904
    %v1906 = vrcp.pop %v1890
    %v1907 = vmul.f32 %v1890, %v1906
    %v1908 = vsub.f32 1.0, %v1907
    %v1909 = vmul.f32 %v1906, %v1908
    %v1910 = vadd.f32 %v1906, %v1909
    %vm1911 = vweird.f32 %v1890
    %vm1912 = vweird.f32 %v1906
    %vm1913 = vmor %vm1911, %vm1912
    %v1914 = vsel %vm1913, %v1906, %v1910
    %v1915 = vand.u32 2147483647, %v1890
    %vm1916 = vcmp.eq.f32.partialorder %v1915, 8.507059e+37
    %v1917 = vand.u32 %v1890, 2147483648
    %v1918 = vor.u32 1.1754944e-38, %v1917
    %v1919 = vsel %vm1916, %v1918, %v1914
    %v1920 = vmul.f32 1.0, %v1919
    %v1921 = vadd.f32 %v1859, %v397
    %v1922 = vadd.f32 %v1861, %v397
    %1925 = vrot.lane.b32.xlu0 %v1921, 64
    %v1926 = vpop.permute.xlu0 %1925
    %1927 = vrot.lane.b32.xlu0 %v1922, 64
    %v1928 = vpop.permute.xlu0 %1927
    %v1931 = vmul.f32 %v1905, %v1926
    %v1932 = vmul.f32 %v1920, %v1928
    %1935 = vrot.lane.b32.xlu0 %v1931, 64
    %v1936 = vpop.permute.xlu0 %1935
    %1937 = vrot.lane.b32.xlu0 %v1932, 64
    %v1938 = vpop.permute.xlu0 %1937
    %v1941 = vadd.f32 %v1877, %v1936
    %v1942 = vadd.f32 %v1878, %v1938
    %v1943 = vtanh.pop %v1941
    %v1944 = vtanh.pop %v1942
    %v1945 = vsub.f32 1.0, %v1905
    %v1946 = vsub.f32 1.0, %v1920
    %1949 = vrot.lane.b32.xlu0 %v1943, 96
    %v1950 = vpop.permute.xlu0 %1949
    %1951 = vrot.lane.b32.xlu0 %v1944, 96
    %v1952 = vpop.permute.xlu0 %1951
    %v1955 = vmul.f32 %v1945, %v1950
    %v1956 = vmul.f32 %v1946, %v1952
    %1959 = vrot.lane.b32.xlu0 %v1843, 32
    %v1960 = vpop.permute.xlu0 %1959
    %1961 = vrot.lane.b32.xlu0 %v1844, 32
    %v1962 = vpop.permute.xlu0 %1961
    %v1965 = vmul.f32 %v1905, %v1960
    %v1966 = vmul.f32 %v1920, %v1962
    %v1967 = vadd.f32 %v1955, %v1965
    %v1968 = vadd.f32 %v1956, %v1966
    %v1969 = vadd.f32 %v1879, %v1873
    %v1970 = vadd.f32 %v1880, %v1875
    %v1971 = vxor.u32 %v1969, 2147483648
    %v1972 = vxor.u32 %v1970, 2147483648
    %v1973 = vmul.f32 %v1971, 1.442695
    %v1974 = vpow.pop %v1973
    %v1975 = vmul.f32 %v1972, 1.442695
    %v1976 = vpow.pop %v1975
    %v1977 = vadd.f32 %v1974, 1.0
    %v1978 = vadd.f32 %v1976, 1.0
    %v1979 = vrcp.pop %v1977
    %v1980 = vmul.f32 %v1977, %v1979
    %v1981 = vsub.f32 1.0, %v1980
    %v1982 = vmul.f32 %v1979, %v1981
    %v1983 = vadd.f32 %v1979, %v1982
    %vm1984 = vweird.f32 %v1977
    %vm1985 = vweird.f32 %v1979
    %vm1986 = vmor %vm1984, %vm1985
    %v1987 = vsel %vm1986, %v1979, %v1983
    %v1988 = vand.u32 2147483647, %v1977
    %vm1989 = vcmp.eq.f32.partialorder %v1988, 8.507059e+37
    %v1990 = vand.u32 %v1977, 2147483648
    %v1991 = vor.u32 1.1754944e-38, %v1990
    %v1992 = vsel %vm1989, %v1991, %v1987
    %v1993 = vmul.f32 1.0, %v1992
    %v1994 = vrcp.pop %v1978
    %v1995 = vmul.f32 %v1978, %v1994
    %v1996 = vsub.f32 1.0, %v1995
    %v1997 = vmul.f32 %v1994, %v1996
    %v1998 = vadd.f32 %v1994, %v1997
    %vm1999 = vweird.f32 %v1978
    %vm2000 = vweird.f32 %v1994
    %vm2001 = vmor %vm1999, %vm2000
    %v2002 = vsel %vm2001, %v1994, %v1998
    %v2003 = vand.u32 2147483647, %v1978
    %vm2004 = vcmp.eq.f32.partialorder %v2003, 8.507059e+37
    %v2005 = vand.u32 %v1978, 2147483648
    %v2006 = vor.u32 1.1754944e-38, %v2005
    %v2007 = vsel %vm2004, %v2006, %v2002
    %v2008 = vmul.f32 1.0, %v2007
    %v2009 = vadd.f32 %v1873, %v480
    %v2010 = vadd.f32 %v1875, %v480
    %2013 = vrot.lane.b32.xlu0 %v2009, 64
    %v2014 = vpop.permute.xlu0 %2013
    %2015 = vrot.lane.b32.xlu0 %v2010, 64
    %v2016 = vpop.permute.xlu0 %2015
    %v2019 = vmul.f32 %v1993, %v2014
    %v2020 = vmul.f32 %v2008, %v2016
    %2023 = vrot.lane.b32.xlu0 %v2019, 64
    %v2024 = vpop.permute.xlu0 %2023
    %2025 = vrot.lane.b32.xlu0 %v2020, 64
    %v2026 = vpop.permute.xlu0 %2025
    %v2029 = vadd.f32 %v1879, %v2024
    %v2030 = vadd.f32 %v1880, %v2026
    %v2031 = vtanh.pop %v2029
    %v2032 = vtanh.pop %v2030
    %v2033 = vsub.f32 1.0, %v1993
    %v2034 = vsub.f32 1.0, %v2008
    %2037 = vrot.lane.b32.xlu0 %v2031, 96
    %v2038 = vpop.permute.xlu0 %2037
    %2039 = vrot.lane.b32.xlu0 %v2032, 96
    %v2040 = vpop.permute.xlu0 %2039
    %v2043 = vmul.f32 %v2033, %v2038
    %v2044 = vmul.f32 %v2034, %v2040
    %v2045 = vmul.f32 %v1993, %v1843
    %v2046 = vmul.f32 %v2008, %v1844
    %v2047 = vadd.f32 %v2043, %v2045
    %v2048 = vadd.f32 %v2044, %v2046
    %2051 = vrot.lane.b32.xlu0 %v1967, 96
    %v2052 = vpop.permute.xlu0 %2051
    %2053 = vrot.lane.b32.xlu0 %v1968, 96
    %v2054 = vpop.permute.xlu0 %2053
    %2057 = vst.msk [vmem:[#allocation3 + $0x70] sm:$0xff] %vm114, %v2052
    %2058 = vst.msk [vmem:[#allocation3 + $0x78] sm:$0xff] %vm114, %v2054
    %2059 = vst.msk [vmem:[#allocation3] sm:$0xff] %vm532, %v2047
    %2060 = vst.msk [vmem:[#allocation3 + $0x8] sm:$0xff] %vm532, %v2048
    %v2061 = vld [vmem:[#allocation3] sm:$0xff]
    %v2062 = vld [vmem:[#allocation3 + $0x8] sm:$0xff]
    %v2063 = vld [vmem:[#allocation3 + $0x10] sm:$0xff]
    %v2064 = vld [vmem:[#allocation3 + $0x18] sm:$0xff]
    %v2065 = vld [vmem:[#allocation3 + $0x20] sm:$0xff]
    %v2066 = vld [vmem:[#allocation3 + $0x28] sm:$0xff]
    %v2067 = vld [vmem:[#allocation3 + $0x30] sm:$0xff]
    %v2068 = vld [vmem:[#allocation3 + $0x38] sm:$0xff]
    %v2069 = vld [vmem:[#allocation3 + $0x40] sm:$0xff]
    %v2070 = vld [vmem:[#allocation3 + $0x48] sm:$0xff]
    %v2071 = vld [vmem:[#allocation3 + $0x50] sm:$0xff]
    %v2072 = vld [vmem:[#allocation3 + $0x58] sm:$0xff]
    %v2073 = vld [vmem:[#allocation3 + $0x60] sm:$0xff]
    %v2074 = vld [vmem:[#allocation3 + $0x68] sm:$0xff]
    %v2075 = vld [vmem:[#allocation3 + $0x70] sm:$0xff]
    %v2076 = vld [vmem:[#allocation3 + $0x78] sm:$0xff]
    %v2077 = vpack.c.bf16 %v2062, %v2061
    %v2078 = vpack.c.bf16 %v2064, %v2063
    %v2079 = vpack.c.bf16 %v2066, %v2065
    %v2080 = vpack.c.bf16 %v2068, %v2067
    %v2081 = vpack.c.bf16 %v2070, %v2069
    %v2082 = vpack.c.bf16 %v2072, %v2071
    %v2083 = vpack.c.bf16 %v2074, %v2073
    %v2084 = vpack.c.bf16 %v2076, %v2075
    %v2085 = vld [vmem:[%s5] sm:$0xf]
    %v2086 = vld [vmem:[%s5 + $0x4] sm:$0xf]
    %v2087 = vld [vmem:[%s5 + $0x8] sm:$0xf]
    %v2088 = vld [vmem:[%s5 + $0xc] sm:$0xf]
    %v2089 = vld [vmem:[%s5 + $0x10] sm:$0xf]
    %v2090 = vld [vmem:[%s5 + $0x14] sm:$0xf]
    %v2091 = vld [vmem:[%s5 + $0x18] sm:$0xf]
    %v2092 = vld [vmem:[%s5 + $0x1c] sm:$0xf]
    %v2093 = vld [vmem:[%s6] sm:$0x1]
    %v2095 = vperm.slane %v2093, 0
    %v2105 = vunpack.c.l.b16 %v2085
    %v2106 = vunpack.c.l.b16 %v2086
    %v2107 = vunpack.c.l.b16 %v2087
    %v2108 = vunpack.c.l.b16 %v2088
    %v2109 = vunpack.c.l.b16 %v2089
    %v2110 = vunpack.c.l.b16 %v2090
    %v2111 = vunpack.c.l.b16 %v2091
    %v2112 = vunpack.c.l.b16 %v2092
    %v2113 = vpack.c.b16 %v2106, %v2105
    %v2114 = vpack.c.b16 %v2108, %v2107
    %v2115 = vpack.c.b16 %v2110, %v2109
    %v2116 = vpack.c.b16 %v2112, %v2111
    %v2122 = vsel %vm318, %v2077, 0
    %v2125 = vsel %vm318, %v2078, 0
    %v2128 = vsel %vm318, %v2079, 0
    %v2131 = vsel %vm318, %v2080, 0
    %v2134 = vsel %vm318, %v2081, 0
    %v2137 = vsel %vm318, %v2082, 0
    %v2140 = vsel %vm318, %v2083, 0
    %v2143 = vsel %vm318, %v2084, 0
    %2145 = vmatpush.bf16.msra.mxu0 0
    %2146 = vmatpush.bf16.msra.mxu0 0
    %2147 = vmatpush.bf16.msra.mxu0 0
    %2148 = vmatpush.bf16.msra.mxu0 0
    %2149 = vmatpush.bf16.msra.mxu0 %v2116
    %2150 = vmatpush.bf16.msra.mxu0 %v2115
    %2151 = vmatpush.bf16.msra.mxu0 %v2114
    %2152 = vmatpush.bf16.msra.mxu0 %v2113
    %2153 = vmatmul.bf16.gmra.mxu0 %v2122
    %v2154 = vpop.f32.mrf.mxu0
    %v2155 = vadd.f32 %v2095, %v2154
    %v2156 = vpop.f32.mrf.mxu0
    %v2157 = vadd.f32 %v2095, %v2156
    %2158 = vmatmul.bf16.gmra.mxu0 %v2125
    %v2159 = vpop.f32.mrf.mxu0
    %v2160 = vadd.f32 %v2095, %v2159
    %v2161 = vpop.f32.mrf.mxu0
    %v2162 = vadd.f32 %v2095, %v2161
    %2163 = vmatmul.bf16.gmra.mxu0 %v2128
    %v2164 = vpop.f32.mrf.mxu0
    %v2165 = vadd.f32 %v2095, %v2164
    %v2166 = vpop.f32.mrf.mxu0
    %v2167 = vadd.f32 %v2095, %v2166
    %2168 = vmatmul.bf16.gmra.mxu0 %v2131
    %v2169 = vpop.f32.mrf.mxu0
    %v2170 = vadd.f32 %v2095, %v2169
    %v2171 = vpop.f32.mrf.mxu0
    %v2172 = vadd.f32 %v2095, %v2171
    %2173 = vmatmul.bf16.gmra.mxu0 %v2134
    %v2174 = vpop.f32.mrf.mxu0
    %v2175 = vadd.f32 %v2095, %v2174
    %v2176 = vpop.f32.mrf.mxu0
    %v2177 = vadd.f32 %v2095, %v2176
    %2178 = vmatmul.bf16.gmra.mxu0 %v2137
    %v2179 = vpop.f32.mrf.mxu0
    %v2180 = vadd.f32 %v2095, %v2179
    %v2181 = vpop.f32.mrf.mxu0
    %v2182 = vadd.f32 %v2095, %v2181
    %2183 = vmatmul.bf16.gmra.mxu0 %v2140
    %v2184 = vpop.f32.mrf.mxu0
    %v2185 = vadd.f32 %v2095, %v2184
    %v2186 = vpop.f32.mrf.mxu0
    %v2187 = vadd.f32 %v2095, %v2186
    %2188 = vmatmul.bf16.gmra.mxu0 %v2143
    %v2189 = vpop.f32.mrf.mxu0
    %v2190 = vadd.f32 %v2095, %v2189
    %v2191 = vpop.f32.mrf.mxu0
    %v2192 = vadd.f32 %v2095, %v2191
    %2193 = vdwg.mxu0
    %2194 = vst [vmem:[#allocation4] sm:$0xff] %v2155
    %2195 = vst [vmem:[#allocation4 + $0x8] sm:$0xff] %v2157
    %2196 = vst [vmem:[#allocation4 + $0x10] sm:$0xff] %v2160
    %2197 = vst [vmem:[#allocation4 + $0x18] sm:$0xff] %v2162
    %2198 = vst [vmem:[#allocation4 + $0x20] sm:$0xff] %v2165
    %2199 = vst [vmem:[#allocation4 + $0x28] sm:$0xff] %v2167
    %2200 = vst [vmem:[#allocation4 + $0x30] sm:$0xff] %v2170
    %2201 = vst [vmem:[#allocation4 + $0x38] sm:$0xff] %v2172
    %2202 = vst [vmem:[#allocation4 + $0x40] sm:$0xff] %v2175
    %2203 = vst [vmem:[#allocation4 + $0x48] sm:$0xff] %v2177
    %2204 = vst [vmem:[#allocation4 + $0x50] sm:$0xff] %v2180
    %2205 = vst [vmem:[#allocation4 + $0x58] sm:$0xff] %v2182
    %2206 = vst [vmem:[#allocation4 + $0x60] sm:$0xff] %v2185
    %2207 = vst [vmem:[#allocation4 + $0x68] sm:$0xff] %v2187
    %2208 = vst [vmem:[#allocation4 + $0x70] sm:$0xff] %v2190
    %2209 = vst [vmem:[#allocation4 + $0x78] sm:$0xff] %v2192
    // Predicated region
    $region30: #{gru_pos_tagger_forward.1} parent=1 // pred_check
      _
    $region31: #{gru_pos_tagger_forward.1} parent=1 // pred_check_branch
      %2211 = sbr.rel (0) target = $region33
    $region32: #{gru_pos_tagger_forward.1} parent=1 // pred_region
      %2213 = vsyncadd [#allocation5], 0
      %s2214 = sshll.u32 [#allocation4], 4
      %s2215 = int_to_ptr.vmem [resolvable:$true] %s2214
      %s2216 = sshll.u32 %s7, 4
      %s2217 = int_to_ptr.hbm [resolvable:$true] %s2216
      %2222 = dma.vmem_to_hbm [thread:$0]  %s2215, 2048, %s2217, [#allocation5], 128, 128, 8
    $region33: #{gru_pos_tagger_forward.1} parent=1 // pred_fallthru
      _
    // Predicated region
    $region34: #{gru_pos_tagger_forward.1} parent=1 // pred_check
      _
    $region35: #{gru_pos_tagger_forward.1} parent=1 // pred_check_branch
      %2224 = sbr.rel (0) target = $region37
    $region36: #{gru_pos_tagger_forward.1} parent=1 // pred_region
      %2226 = dma.done [#allocation5], 2048
    $region37: #{gru_pos_tagger_forward.1} parent=1 // pred_fallthru
      _
    %2227 = vsyncpa [#allocation5], 1

</llo_original>
